<compile_context>
chip_gen: v6e
topology: v6e:2x2x1
jax: 0.10.0
libtpu: 0.0.40
codegen_flags: <defaults>
</compile_context>

<pallas_src>
import functools

import numpy as np
import jax
import jax.numpy as jnp
from jax.experimental import pallas as pl
from jax.experimental.pallas import tpu as pltpu


# ----------------------------------------------------------------------------
# One-time adjacency preparation (hoist the cast/quantization out of the call).
# ----------------------------------------------------------------------------
def prepare_adjacency(norm_matrix, dtype=jnp.bfloat16):
    """Cast / quantize the (static) adjacency ONCE; cache the result across layers/steps.

    Returns (a, row_scale) with  diag(row_scale) @ float(a) ≈ norm_matrix.
    Supported dtypes: float32, bfloat16 (row_scale = 1), int8 and fp8
    (per-row symmetric scale).
    """
    n = norm_matrix.shape[0]
    d = np.dtype(dtype)
    if d.itemsize >= 2:                                   # f32 / bf16 stream, no scaling
        return norm_matrix.astype(dtype), jnp.ones((n, 1), jnp.float32)
    amax = jnp.max(jnp.abs(norm_matrix), axis=1, keepdims=True)
    if d == np.dtype(np.int8):                            # symmetric per-row int8
        scale = jnp.maximum(amax, 1e-30) / 127.0
        a = jnp.clip(jnp.round(norm_matrix / scale), -127, 127).astype(jnp.int8)
    else:                                                 # fp8 (e.g. jnp.float8_e4m3fn)
        scale = jnp.maximum(amax, 1e-30) / 240.0
        a = (norm_matrix / scale).astype(dtype)
    return a, scale.astype(jnp.float32)


# ----------------------------------------------------------------------------
# Kernel.  Grid = (row tiles of N, K tiles of N);  K is the innermost axis.
# ----------------------------------------------------------------------------
def _aggregator_bi_kernel(a_ref, egoc_ref, egor_ref, scale_ref, ar_ref, rel_ref,
                          w1_ref, b1_ref, w2_ref, b2_ref, out_ref, side_acc,
                          *, tk, egoc_resident):
    k = pl.program_id(1)

    @pl.when(k == 0)
    def _init():
        side_acc[...] = jnp.zeros_like(side_acc)

    # Dominant HBM stream: the (tm, tk) adjacency tile.
    a_tile = a_ref[...]
    if a_ref.dtype.itemsize == 1:          # int8 / fp8 stream -> bf16 for the MXU
        a_tile = a_tile.astype(jnp.bfloat16)

    if egoc_resident:
        row0 = pl.multiple_of(k * tk, tk)
        ego_k = egoc_ref[pl.ds(row0, tk), :]
    else:
        ego_k = egoc_ref[...]

    side_acc[...] += jnp.dot(a_tile, ego_k, preferred_element_type=jnp.float32)

    @pl.when(k == pl.num_programs(1) - 1)
    def _epilogue():
        ego = egor_ref[...]                # f32 row tile of ego_embeddings
        # Per-row dequant scale (all-ones for f32/bf16 adjacency) + relation term.
        side = (side_acc[...] * scale_ref[...]
                + 0.1 * jnp.dot(ar_ref[...], rel_ref[...],
                                preferred_element_type=jnp.float32))

        sum_emb = jnp.dot(ego + side, w1_ref[...],
                          preferred_element_type=jnp.float32) + b1_ref[...]
        sum_emb = jnp.where(sum_emb > 0, sum_emb, 0.01 * sum_emb)

        bi_emb = jnp.dot(ego * side, w2_ref[...],
                         preferred_element_type=jnp.float32) + b2_ref[...]
        bi_emb = jnp.where(bi_emb > 0, bi_emb, 0.01 * bi_emb)

        out_ref[...] = (bi_emb + sum_emb).astype(out_ref.dtype)


# ----------------------------------------------------------------------------
# Wrapper.
# ----------------------------------------------------------------------------
def aggregator_bi(a, a_row_scale, ego_embeddings, norm_matrix_r, rel_embeddings,
                  w1, b1, w2, b2, *, tm=512, tk=4096, a_buffers=2,
                  egoc_resident=None):
    """Pallas aggregator (aggregator_type='bi').

    a:              [N, N] adjacency already in its streaming dtype
                    (from prepare_adjacency: f32 / bf16 / int8 / fp8).
    a_row_scale:    [N, 1] f32 per-row dequant scale (or None -> ones).
    ego_embeddings: [N, D_in] f32
    norm_matrix_r:  [N, R] f32
    rel_embeddings: [R, D_in] f32
    w1, w2:         [D_in, D_out] f32  (pre-transposed vs. PyTorch Linear weight)
    b1, b2:         [1, D_out] f32
    a_buffers:      pipeline depth for the A stream (2 = standard double buffer).
    Returns [N, D_out] f32.
    """
    N, D_in = ego_embeddings.shape
    R = rel_embeddings.shape[0]
    D_out = w1.shape[1]
    assert a.shape == (N, N)
    assert norm_matrix_r.shape == (N, R)

    a_bytes = np.dtype(a.dtype).itemsize
    ec_dtype = jnp.float32 if a.dtype == jnp.float32 else jnp.bfloat16
    ec_bytes = np.dtype(ec_dtype).itemsize
    ego_c = ego_embeddings.astype(ec_dtype)        # contraction operand of A @ ego (tiny cast)
    ego_f32 = ego_embeddings.astype(jnp.float32)   # epilogue operand

    if a_row_scale is None:
        a_row_scale = jnp.ones((N, 1), jnp.float32)
    a_row_scale = a_row_scale.astype(jnp.float32).reshape(N, 1)

    # Tile selection / alignment (sublane packing depends on the streaming dtype).
    min_sub = {4: 8, 2: 16, 1: 32}.get(a_bytes, 8)
    tm = min(tm, N)
    tk = min(tk, N)
    # Keep >= 2 row tiles so the "parallel" axis can split across TensorCores (v7x).
    while (N // tm < 2 and tm % 2 == 0 and (tm // 2) % min_sub == 0
           and N % (tm // 2) == 0):
        tm //= 2
    assert N % tm == 0 and N % tk == 0, "N must be divisible by tile sizes"
    assert (tm % min_sub == 0) or (tm == N), f"tm must be a multiple of {min_sub}"
    assert (tk % 128 == 0) or (tk == N), "tk must be a multiple of 128"

    def rup(x, m):
        return ((x + m - 1) // m) * m

    lane = 128
    D_in_p, D_out_p, R_p = rup(D_in, lane), rup(D_out, lane), rup(R, lane)

    # Keep the ego contraction operand VMEM-resident (single DMA) when small.
    if egoc_resident is None:
        egoc_resident = (N * D_in_p * ec_bytes) <= (8 << 20)
    egoc_resident = bool(egoc_resident)

    # Generation-aware VMEM cap (v7x has 64 MiB/TC; v5e/v6e 128 MiB).
    try:
        info = pltpu.get_tpu_info()
        vmem_cap = int(getattr(info, "vmem_capacity_bytes", 0)) or (64 << 20)
    except Exception:
        vmem_cap = 64 << 20
    vmem_ceiling = max(vmem_cap - (8 << 20), 16 << 20)

    nbuf = max(int(a_buffers), 2)
    est = (nbuf * tm * rup(tk, lane) * a_bytes                       # A stream
           + (2 * N * D_in_p * ec_bytes if egoc_resident
              else 2 * rup(tk, 8) * D_in_p * ec_bytes)               # ego (contraction)
           + 2 * tm * D_in_p * 4                                     # ego rows (epilogue)
           + 2 * tm * lane * 4                                       # row scale
           + 2 * tm * R_p * 4                                        # A_r rows
           + 2 * rup(R, 8) * D_in_p * 4                              # rel
           + 4 * rup(D_in, 8) * D_out_p * 4                          # W1, W2
           + 4 * 8 * D_out_p * 4                                     # b1, b2
           + 2 * tm * D_out_p * 4                                    # out tile
           + tm * D_in_p * 4)                                        # side_acc scratch
    vmem_limit = int(min(max(est + est // 4 + (2 << 20), 32 << 20), vmem_ceiling))

    flops = (2 * N * N * D_in + 2 * N * R * D_in
             + 4 * N * D_in * D_out + 8 * N * D_out)
    bytes_accessed = (N * N * a_bytes + N * R * 4 + N * D_in * (ec_bytes + 4)
                      + N * 4 + R * D_in * 4 + 2 * D_in * D_out * 4
                      + 2 * D_out * 4 + N * D_out * 4)
    cost = pl.CostEstimate(flops=flops, transcendentals=0,
                           bytes_accessed=bytes_accessed)

    a_spec_kwargs = {}
    if nbuf != 2:
        a_spec_kwargs["pipeline_mode"] = pl.Buffered(nbuf)
    a_spec = pl.BlockSpec((tm, tk), lambda i, k: (i, k), **a_spec_kwargs)

    if egoc_resident:
        egoc_spec = pl.BlockSpec((N, D_in), lambda i, k: (0, 0))     # resident, slice per k
    else:
        egoc_spec = pl.BlockSpec((tk, D_in), lambda i, k: (k, 0))    # streamed per k

    kernel = functools.partial(_aggregator_bi_kernel, tk=tk,
                               egoc_resident=egoc_resident)

    return pl.pallas_call(
        kernel,
        out_shape=jax.ShapeDtypeStruct((N, D_out), jnp.float32),
        grid=(N // tm, N // tk),
        in_specs=[
            a_spec,                                              # A tile (dominant stream)
            egoc_spec,                                           # ego (contraction operand)
            pl.BlockSpec((tm, D_in), lambda i, k: (i, 0)),       # ego rows (epilogue, f32)
            pl.BlockSpec((tm, 1), lambda i, k: (i, 0)),          # per-row dequant scale
            pl.BlockSpec((tm, R), lambda i, k: (i, 0)),          # A_r row tile
            pl.BlockSpec((R, D_in), lambda i, k: (0, 0)),        # rel (resident)
            pl.BlockSpec((D_in, D_out), lambda i, k: (0, 0)),    # W1^T (resident)
            pl.BlockSpec((1, D_out), lambda i, k: (0, 0)),       # b1
            pl.BlockSpec((D_in, D_out), lambda i, k: (0, 0)),    # W2^T (resident)
            pl.BlockSpec((1, D_out), lambda i, k: (0, 0)),       # b2
        ],
        out_specs=pl.BlockSpec((tm, D_out), lambda i, k: (i, 0)),
        scratch_shapes=[pltpu.VMEM((tm, D_in), jnp.float32)],
        compiler_params=pltpu.CompilerParams(
            dimension_semantics=("parallel", "arbitrary"),
            vmem_limit_bytes=vmem_limit),
        cost_estimate=cost,
    )(a, ego_c, ego_f32, a_row_scale, norm_matrix_r, rel_embeddings,
      w1, b1, w2, b2)


# ----------------------------------------------------------------------------
# Pure-JAX reference.
# ----------------------------------------------------------------------------
def _reference(norm_matrix, ego, norm_matrix_r, rel, w1, b1, w2, b2):
    hp = jax.lax.Precision.HIGHEST
    side = (jnp.dot(norm_matrix, ego, precision=hp)
            + 0.1 * jnp.dot(norm_matrix_r, rel, precision=hp))
    leaky = lambda x: jnp.where(x > 0, x, 0.01 * x)
    sum_emb = leaky(jnp.dot(ego + side, w1, precision=hp) + b1)
    bi_emb = leaky(jnp.dot(ego * side, w2, precision=hp) + b2)
    return bi_emb + sum_emb


if __name__ == "__main__":
    # Small shapes consistent with the module: N nodes, R relation rows,
    # input_dim = output_dim = 32.  Tiles chosen so the grid (4, 2) exercises
    # the K-accumulation loop and the parallel row axis.
    N, R, D_in, D_out = 256, 64, 32, 32

    key = jax.random.PRNGKey(0)
    k_a, k_e, k_ar, k_r, k_w1, k_b1, k_w2, k_b2 = jax.random.split(key, 8)

    norm_matrix = jax.random.uniform(k_a, (N, N), jnp.float32) * 0.05
    ego_embeddings = jax.random.normal(k_e, (N, D_in), jnp.float32)
    norm_matrix_r = jax.random.uniform(k_ar, (N, R), jnp.float32) * 0.05
    rel_embeddings = jax.random.normal(k_r, (R, D_in), jnp.float32)

    bound = 1.0 / np.sqrt(D_in)
    w1 = jax.random.uniform(k_w1, (D_in, D_out), jnp.float32, -bound, bound)
    b1 = jax.random.uniform(k_b1, (1, D_out), jnp.float32, -bound, bound)
    w2 = jax.random.uniform(k_w2, (D_in, D_out), jnp.float32, -bound, bound)
    b2 = jax.random.uniform(k_b2, (1, D_out), jnp.float32, -bound, bound)

    ref = _reference(norm_matrix, ego_embeddings, norm_matrix_r, rel_embeddings,
                     w1, b1, w2, b2)

    # Adjacency is static across GNN layers/steps: prepare it ONCE and reuse.
    # 1) Exact f32 adjacency path (tight check; resident ego operand).
    a32, s32 = prepare_adjacency(norm_matrix, jnp.float32)
    out_f32 = jax.block_until_ready(
        aggregator_bi(a32, s32, ego_embeddings, norm_matrix_r, rel_embeddings,
                      w1, b1, w2, b2, tm=64, tk=128))
    assert out_f32.shape == (N, D_out)
    err_f32 = float(jnp.max(jnp.abs(out_f32 - ref)))
    assert err_f32 < 5e-3, f"f32 path mismatch vs reference: max abs err {err_f32}"

    # 2) bf16 adjacency stream (halved HBM traffic), streamed ego operand path.
    a16, s16 = prepare_adjacency(norm_matrix, jnp.bfloat16)
    out_bf16 = jax.block_until_ready(
        aggregator_bi(a16, s16, ego_embeddings, norm_matrix_r, rel_embeddings,
                      w1, b1, w2, b2, tm=64, tk=128, egoc_resident=False))
    err_bf16 = float(jnp.max(jnp.abs(out_bf16 - ref)))
    assert err_bf16 < 1e-1, f"bf16 path error too large: {err_bf16}"

    # 3) int8 adjacency stream with per-row dequant scale (quarter HBM traffic).
    a8, s8 = prepare_adjacency(norm_matrix, jnp.int8)
    out_i8 = jax.block_until_ready(
        aggregator_bi(a8, s8, ego_embeddings, norm_matrix_r, rel_embeddings,
                      w1, b1, w2, b2, tm=64, tk=128))
    err_i8 = float(jnp.max(jnp.abs(out_i8 - ref)))
    assert err_i8 < 1.5e-1, f"int8 path error too large: {err_i8}"

    print("KERNEL_OK")
</pallas_src>

<mosaic_0001>
module attributes {stable_mosaic.version = 11 : i64} {
  func.func @_aggregator_bi_kernel(%arg0: i32, %arg1: i32, %arg2: memref<64x128xf32, #tpu.memory_space<vmem>>, %arg3: memref<256x32xf32, #tpu.memory_space<vmem>>, %arg4: memref<64x32xf32, #tpu.memory_space<vmem>>, %arg5: memref<64x1xf32, #tpu.memory_space<vmem>>, %arg6: memref<64x64xf32, #tpu.memory_space<vmem>>, %arg7: memref<64x32xf32, #tpu.memory_space<vmem>>, %arg8: memref<32x32xf32, #tpu.memory_space<vmem>>, %arg9: memref<1x32xf32, #tpu.memory_space<vmem>>, %arg10: memref<32x32xf32, #tpu.memory_space<vmem>>, %arg11: memref<1x32xf32, #tpu.memory_space<vmem>>, %arg12: memref<64x32xf32, #tpu.memory_space<vmem>>, %arg13: memref<64x32xf32, #tpu.memory_space<vmem>>) attributes {dimension_semantics = [#tpu.dimension_semantics<parallel>, #tpu.dimension_semantics<arbitrary>], iteration_bounds = array<i64: 4, 2>, scalar_prefetch = 0 : i64, scratch_operands = 1 : i64, tpu.core_type = #tpu.core_type<tc>, window_params = [{transform_indices = @transform_0, window_bounds = array<i64: 64, 128>}, {pipeline_mode = #tpu.pipeline_mode<synchronous>, transform_indices = @transform_1, window_bounds = array<i64: 256, 32>}, {transform_indices = @transform_2, window_bounds = array<i64: 64, 32>}, {transform_indices = @transform_3, window_bounds = array<i64: 64, 1>}, {transform_indices = @transform_4, window_bounds = array<i64: 64, 64>}, {pipeline_mode = #tpu.pipeline_mode<synchronous>, transform_indices = @transform_5, window_bounds = array<i64: 64, 32>}, {pipeline_mode = #tpu.pipeline_mode<synchronous>, transform_indices = @transform_6, window_bounds = array<i64: 32, 32>}, {pipeline_mode = #tpu.pipeline_mode<synchronous>, transform_indices = @transform_7, window_bounds = array<i64: 1, 32>}, {pipeline_mode = #tpu.pipeline_mode<synchronous>, transform_indices = @transform_8, window_bounds = array<i64: 32, 32>}, {pipeline_mode = #tpu.pipeline_mode<synchronous>, transform_indices = @transform_9, window_bounds = array<i64: 1, 32>}, {transform_indices = @transform_10, window_bounds = array<i64: 64, 32>}]} {
    %c0_i32 = arith.constant 0 : i32
    %0 = arith.cmpi eq, %arg1, %c0_i32 : i32
    %1 = arith.extui %0 : i1 to i32
    %c0_i32_0 = arith.constant 0 : i32
    %2 = arith.cmpi ne, %1, %c0_i32_0 : i32
    scf.if %2 {
      %cst_8 = arith.constant 0.000000e+00 : f32
      %15 = vector.broadcast %cst_8 : f32 to vector<64x32xf32>
      %c0_9 = arith.constant 0 : index
      %c0_10 = arith.constant 0 : index
      %16 = vector.load %arg13[%c0_9, %c0_10] : memref<64x32xf32, #tpu.memory_space<vmem>>, vector<64x32xf32>
      tpu.vector_store %arg13[%c0_9, %c0_10], %15 {strides = array<i32>} : memref<64x32xf32, #tpu.memory_space<vmem>>, vector<64x32xf32>,
    } else {
    }
    %c0 = arith.constant 0 : index
    %c0_1 = arith.constant 0 : index
    %3 = vector.load %arg2[%c0, %c0_1] : memref<64x128xf32, #tpu.memory_space<vmem>>, vector<64x128xf32>
    %c128_i32 = arith.constant 128 : i32
    %4 = arith.muli %arg1, %c128_i32 : i32
    %5 = tpu.assume_multiple %4, 128 : i32
    %6 = arith.index_cast %5 : i32 to index
    %c0_2 = arith.constant 0 : index
    %7 = vector.load %arg3[%6, %c0_2] : memref<256x32xf32, #tpu.memory_space<vmem>>, vector<128x32xf32>
    %c0_3 = arith.constant 0 : index
    %c0_4 = arith.constant 0 : index
    %8 = vector.load %arg13[%c0_3, %c0_4] : memref<64x32xf32, #tpu.memory_space<vmem>>, vector<64x32xf32>
    %cst = arith.constant dense<0.000000e+00> : vector<64x32xf32>
    %9 = tpu.matmul %3, %7, %cst {dimension_numbers = #tpu.dot_dimension_numbers<[1], [0], [0], [1], [0, 0, 1, 1], [], []>} : vector<64x128xf32>, vector<128x32xf32>, vector<64x32xf32> -> vector<64x32xf32>
    %10 = arith.addf %8, %9 : vector<64x32xf32>
    %c0_5 = arith.constant 0 : index
    %c0_6 = arith.constant 0 : index
    %11 = vector.load %arg13[%c0_5, %c0_6] : memref<64x32xf32, #tpu.memory_space<vmem>>, vector<64x32xf32>
    tpu.vector_store %arg13[%c0_5, %c0_6], %10 {strides = array<i32>} : memref<64x32xf32, #tpu.memory_space<vmem>>, vector<64x32xf32>,
    %c1_i32 = arith.constant 1 : i32
    %12 = arith.cmpi eq, %arg1, %c1_i32 : i32
    %13 = arith.extui %12 : i1 to i32
    %c0_i32_7 = arith.constant 0 : i32
    %14 = arith.cmpi ne, %13, %c0_i32_7 : i32
    scf.if %14 {
      %c0_8 = arith.constant 0 : index
      %c0_9 = arith.constant 0 : index
      %15 = vector.load %arg4[%c0_8, %c0_9] : memref<64x32xf32, #tpu.memory_space<vmem>>, vector<64x32xf32>
      %c0_10 = arith.constant 0 : index
      %c0_11 = arith.constant 0 : index
      %16 = vector.load %arg13[%c0_10, %c0_11] : memref<64x32xf32, #tpu.memory_space<vmem>>, vector<64x32xf32>
      %c0_12 = arith.constant 0 : index
      %c0_13 = arith.constant 0 : index
      %17 = vector.load %arg5[%c0_12, %c0_13] : memref<64x1xf32, #tpu.memory_space<vmem>>, vector<64x1xf32>
      %18 = vector.broadcast %17 : vector<64x1xf32> to vector<64x32xf32>
      %19 = arith.mulf %16, %18 : vector<64x32xf32>
      %c0_14 = arith.constant 0 : index
      %c0_15 = arith.constant 0 : index
      %20 = vector.load %arg6[%c0_14, %c0_15] : memref<64x64xf32, #tpu.memory_space<vmem>>, vector<64x64xf32>
      %c0_16 = arith.constant 0 : index
      %c0_17 = arith.constant 0 : index
      %21 = vector.load %arg7[%c0_16, %c0_17] : memref<64x32xf32, #tpu.memory_space<vmem>>, vector<64x32xf32>
      %cst_18 = arith.constant dense<0.000000e+00> : vector<64x32xf32>
      %22 = tpu.matmul %20, %21, %cst_18 {dimension_numbers = #tpu.dot_dimension_numbers<[1], [0], [0], [1], [0, 0, 1, 1], [], []>} : vector<64x64xf32>, vector<64x32xf32>, vector<64x32xf32> -> vector<64x32xf32>
      %cst_19 = arith.constant 1.000000e-01 : f32
      %23 = vector.broadcast %cst_19 : f32 to vector<64x32xf32>
      %24 = arith.mulf %23, %22 : vector<64x32xf32>
      %25 = arith.addf %19, %24 : vector<64x32xf32>
      %26 = arith.addf %15, %25 : vector<64x32xf32>
      %c0_20 = arith.constant 0 : index
      %c0_21 = arith.constant 0 : index
      %27 = vector.load %arg8[%c0_20, %c0_21] : memref<32x32xf32, #tpu.memory_space<vmem>>, vector<32x32xf32>
      %cst_22 = arith.constant dense<0.000000e+00> : vector<64x32xf32>
      %28 = tpu.matmul %26, %27, %cst_22 {dimension_numbers = #tpu.dot_dimension_numbers<[1], [0], [0], [1], [0, 0, 1, 1], [], []>} : vector<64x32xf32>, vector<32x32xf32>, vector<64x32xf32> -> vector<64x32xf32>
      %c0_23 = arith.constant 0 : index
      %c0_24 = arith.constant 0 : index
      %29 = vector.load %arg9[%c0_23, %c0_24] : memref<1x32xf32, #tpu.memory_space<vmem>>, vector<1x32xf32>
      %30 = vector.broadcast %29 : vector<1x32xf32> to vector<64x32xf32>
      %31 = arith.addf %28, %30 : vector<64x32xf32>
      %cst_25 = arith.constant 0.000000e+00 : f32
      %32 = vector.broadcast %cst_25 : f32 to vector<64x32xf32>
      %33 = arith.cmpf ogt, %31, %32 : vector<64x32xf32>
      %cst_26 = arith.constant 0.00999999977 : f32
      %34 = vector.broadcast %cst_26 : f32 to vector<64x32xf32>
      %35 = arith.mulf %34, %31 : vector<64x32xf32>
      %36 = arith.select %33, %31, %35 : vector<64x32xi1>, vector<64x32xf32>
      %37 = arith.mulf %15, %25 : vector<64x32xf32>
      %c0_27 = arith.constant 0 : index
      %c0_28 = arith.constant 0 : index
      %38 = vector.load %arg10[%c0_27, %c0_28] : memref<32x32xf32, #tpu.memory_space<vmem>>, vector<32x32xf32>
      %cst_29 = arith.constant dense<0.000000e+00> : vector<64x32xf32>
      %39 = tpu.matmul %37, %38, %cst_29 {dimension_numbers = #tpu.dot_dimension_numbers<[1], [0], [0], [1], [0, 0, 1, 1], [], []>} : vector<64x32xf32>, vector<32x32xf32>, vector<64x32xf32> -> vector<64x32xf32>
      %c0_30 = arith.constant 0 : index
      %c0_31 = arith.constant 0 : index
      %40 = vector.load %arg11[%c0_30, %c0_31] : memref<1x32xf32, #tpu.memory_space<vmem>>, vector<1x32xf32>
      %41 = vector.broadcast %40 : vector<1x32xf32> to vector<64x32xf32>
      %42 = arith.addf %39, %41 : vector<64x32xf32>
      %cst_32 = arith.constant 0.000000e+00 : f32
      %43 = vector.broadcast %cst_32 : f32 to vector<64x32xf32>
      %44 = arith.cmpf ogt, %42, %43 : vector<64x32xf32>
      %cst_33 = arith.constant 0.00999999977 : f32
      %45 = vector.broadcast %cst_33 : f32 to vector<64x32xf32>
      %46 = arith.mulf %45, %42 : vector<64x32xf32>
      %47 = arith.select %44, %42, %46 : vector<64x32xi1>, vector<64x32xf32>
      %48 = arith.addf %47, %36 : vector<64x32xf32>
      %c0_34 = arith.constant 0 : index
      %c0_35 = arith.constant 0 : index
      %49 = vector.load %arg12[%c0_34, %c0_35] : memref<64x32xf32, #tpu.memory_space<vmem>>, vector<64x32xf32>
      tpu.vector_store %arg12[%c0_34, %c0_35], %48 {strides = array<i32>} : memref<64x32xf32, #tpu.memory_space<vmem>>, vector<64x32xf32>,
    } else {
    }
    return
  }
  func.func @transform_0(%arg0: i32, %arg1: i32) -> (i32, i32) {
    %c0_i32 = arith.constant 0 : i32
    return %arg0, %arg1 : i32, i32
  }
  func.func @transform_1(%arg0: i32, %arg1: i32) -> (i32, i32) {
    %c0_i32 = arith.constant 0 : i32
    %c0_i32_0 = arith.constant 0 : i32
    %c0_i32_1 = arith.constant 0 : i32
    return %c0_i32, %c0_i32_0 : i32, i32
  }
  func.func @transform_2(%arg0: i32, %arg1: i32) -> (i32, i32) {
    %c0_i32 = arith.constant 0 : i32
    %c0_i32_0 = arith.constant 0 : i32
    return %arg0, %c0_i32 : i32, i32
  }
  func.func @transform_3(%arg0: i32, %arg1: i32) -> (i32, i32) {
    %c0_i32 = arith.constant 0 : i32
    %c0_i32_0 = arith.constant 0 : i32
    return %arg0, %c0_i32 : i32, i32
  }
  func.func @transform_4(%arg0: i32, %arg1: i32) -> (i32, i32) {
    %c0_i32 = arith.constant 0 : i32
    %c0_i32_0 = arith.constant 0 : i32
    return %arg0, %c0_i32 : i32, i32
  }
  func.func @transform_5(%arg0: i32, %arg1: i32) -> (i32, i32) {
    %c0_i32 = arith.constant 0 : i32
    %c0_i32_0 = arith.constant 0 : i32
    %c0_i32_1 = arith.constant 0 : i32
    return %c0_i32, %c0_i32_0 : i32, i32
  }
  func.func @transform_6(%arg0: i32, %arg1: i32) -> (i32, i32) {
    %c0_i32 = arith.constant 0 : i32
    %c0_i32_0 = arith.constant 0 : i32
    %c0_i32_1 = arith.constant 0 : i32
    return %c0_i32, %c0_i32_0 : i32, i32
  }
  func.func @transform_7(%arg0: i32, %arg1: i32) -> (i32, i32) {
    %c0_i32 = arith.constant 0 : i32
    %c0_i32_0 = arith.constant 0 : i32
    %c0_i32_1 = arith.constant 0 : i32
    return %c0_i32, %c0_i32_0 : i32, i32
  }
  func.func @transform_8(%arg0: i32, %arg1: i32) -> (i32, i32) {
    %c0_i32 = arith.constant 0 : i32
    %c0_i32_0 = arith.constant 0 : i32
    %c0_i32_1 = arith.constant 0 : i32
    return %c0_i32, %c0_i32_0 : i32, i32
  }
  func.func @transform_9(%arg0: i32, %arg1: i32) -> (i32, i32) {
    %c0_i32 = arith.constant 0 : i32
    %c0_i32_0 = arith.constant 0 : i32
    %c0_i32_1 = arith.constant 0 : i32
    return %c0_i32, %c0_i32_0 : i32, i32
  }
  func.func @transform_10(%arg0: i32, %arg1: i32) -> (i32, i32) {
    %c0_i32 = arith.constant 0 : i32
    %c0_i32_0 = arith.constant 0 : i32
    return %arg0, %c0_i32 : i32, i32
  }
}

</mosaic_0001>

<llo_original>
// kernel: tpu_custom_call.1
$region0: #{tpu_custom_call.1}
  #allocation0 [shape = 'u32[]', space=smem, size = 0x4, offset = 0x4, fixed_abs, tag = 'smem constant byte address 0x4 - core index']
  #allocation1 [shape = 'u32[144,128]{1,0:T(1,128)}', space=vmem, size = 0x12000, scoped, tag = 'internal scratch']
  #allocation2 [shape = 'f32[64,32]{1,0:T(8,128)}', space=vmem, size = 0x8000, scoped, tag = 'scratch operand']
  %s0 = inlined_call_operand.vmem [shape: f32[256,256], index: 0, kind: input, shape index: {}]
  %s1 = inlined_call_operand.vmem [shape: f32[256,32], index: 1, kind: input, shape index: {}]
  %s2 = inlined_call_operand.vmem [shape: f32[256,32], index: 2, kind: input, shape index: {}]
  %s3 = inlined_call_operand.vmem [shape: f32[256,1], index: 3, kind: input, shape index: {}]
  %s4 = inlined_call_operand.vmem [shape: f32[256,64], index: 4, kind: input, shape index: {}]
  %s5 = inlined_call_operand.vmem [shape: f32[64,32], index: 5, kind: input, shape index: {}]
  %s6 = inlined_call_operand.vmem [shape: f32[32,32], index: 6, kind: input, shape index: {}]
  %s7 = inlined_call_operand.vmem [shape: f32[1,32], index: 7, kind: input, shape index: {}]
  %s8 = inlined_call_operand.vmem [shape: f32[32,32], index: 8, kind: input, shape index: {}]
  %s9 = inlined_call_operand.vmem [shape: f32[1,32], index: 9, kind: input, shape index: {}]
  %s10 = inlined_call_operand.vmem [shape: f32[256,32], index: 10, kind: output, shape index: {}]
  %s11 = sld [smem:[#allocation0]]
  $region119: #{tpu_custom_call.1} parent=0
    _
  %s13 = ssub.s32 1, %s11
  %s14 = scalar_select 0, %s13, %s11
  $region1: #{tpu_custom_call.1} parent=0
    #allocation3 [shape = 'u8[65536]{0}', space=vmem, size = 0x10000, scoped, tag = 'input window, operand 0']
    loop: start=0, step=1, limit=10
    $region2: #{tpu_custom_call.1} parent=1 // loop_pre_header
      _
    $region3: #{tpu_custom_call.1} parent=1 // loop_header
      %s16 = sphi 0, %s20
      %p17 = scmp.ge.s32.totalorder %s16, 10
      %s23 = sphi 0, %s35
      %s24 = sphi 0, %s31
      %s25 = sphi 0, %s23
      %s26 = sphi 0, %s24
      %s27 = sphi 0, %s25
      %s28 = sphi 0, %s26
      %s40 = sphi 0, %s42
      %s43 = sphi 0, %s40
      %s44 = sphi 0, %s43
      %s60 = sphi 0, %s44
      %s64 = sphi 0, %s64
      %s66 = sphi 0, %s64
      %s67 = sphi 0, %s66
      %s81 = sphi 0, %s67
      %s87 = sphi 0, %s89
      %s90 = sphi 0, %s87
      %s91 = sphi 0, %s90
      %s107 = sphi 0, %s91
      %s113 = sphi 0, %s115
      %s116 = sphi 0, %s113
      %s117 = sphi 0, %s116
      %s133 = sphi 0, %s117
      %s139 = sphi 0, %s141
      %s142 = sphi 0, %s139
      %s143 = sphi 0, %s142
      %s159 = sphi 0, %s143
      %s163 = sphi 0, %s163
      %s165 = sphi 0, %s163
      %s166 = sphi 0, %s165
      %s180 = sphi 0, %s166
      %s184 = sphi 0, %s184
      %s186 = sphi 0, %s184
      %s187 = sphi 0, %s186
      %s201 = sphi 0, %s187
      %s205 = sphi 0, %s205
      %s207 = sphi 0, %s205
      %s208 = sphi 0, %s207
      %s222 = sphi 0, %s208
      %s226 = sphi 0, %s226
      %s228 = sphi 0, %s226
      %s229 = sphi 0, %s228
      %s243 = sphi 0, %s229
      %s247 = sphi 0, %s247
      %s249 = sphi 0, %s247
      %s250 = sphi 0, %s249
      %s264 = sphi 0, %s250
      %s270 = sphi 0, %s272
      %s273 = sphi 0, %s270
      %s274 = sphi 0, %s273
      %s290 = sphi 0, %s274
    $region4: #{tpu_custom_call.1} parent=1 // loop_header_branch
      %19 = sbr.rel (%p17) target = $region8
    $region5: #{tpu_custom_call.1} parent=1 // loop_body
      %s21 = ssub.s32 %s16, 1
      %s22 = ssub.s32 %s16, 2
      %s29 = sadd.s32 1, %s24
      %p30 = scmp.ge.s32.totalorder %s29, 2
      %s31 = scalar_select %p30, 0, %s29
      %s32 = sadd.s32 1, %s23
      %s33 = scalar_select %p30, %s32, %s23
      %p34 = scmp.ge.s32.totalorder %s33, 4
      %s35 = scalar_select %p34, 0, %s33
      %s36 = ssub.s32 %s23, %s35
      %s37 = ssub.s32 %s24, %s31
      %s38 = sor.u32 %s36, %s37
      %p39 = scmp.eq.s32.totalorder %s38, 0
      %s41 = sadd.s32 %s40, 1
      %s42 = scalar_select %p39, %s40, %s41
      %p45 = pneg %p39
      %p46 = scmp.eq.s32.totalorder %s16, 7
      %p47 = por %p45, %p46
      %p48 = scmp.ne.s32.totalorder %s40, %s43
      %p49 = scmp.eq.s32.totalorder %s16, 0
      %p50 = por %p48, %p49
      %p51 = scmp.ne.s32.totalorder %s40, %s43
      %p52 = scmp.eq.s32.totalorder %s21, 7
      %p53 = por %p51, %p52
      %p54 = scmp.ne.s32.totalorder %s43, %s44
      %p55 = scmp.eq.s32.totalorder %s21, 0
      %p56 = por %p54, %p55
      %p57 = scmp.ne.s32.totalorder %s43, %s44
      %p58 = scmp.eq.s32.totalorder %s22, 7
      %p59 = por %p57, %p58
      %p61 = scmp.ne.s32.totalorder %s44, %s60
      %p62 = scmp.eq.s32.totalorder %s22, 0
      %p63 = por %p61, %p62
      %s65 = sadd.s32 %s64, 1
      %p68 = scmp.eq.s32.totalorder %s16, 7
      %p69 = scmp.ne.s32.totalorder %s64, %s66
      %p70 = scmp.eq.s32.totalorder %s16, 0
      %p71 = por %p69, %p70
      %p72 = scmp.ne.s32.totalorder %s64, %s66
      %p73 = scmp.eq.s32.totalorder %s21, 7
      %p74 = por %p72, %p73
      %p75 = scmp.ne.s32.totalorder %s66, %s67
      %p76 = scmp.eq.s32.totalorder %s21, 0
      %p77 = por %p75, %p76
      %p78 = scmp.ne.s32.totalorder %s66, %s67
      %p79 = scmp.eq.s32.totalorder %s22, 7
      %p80 = por %p78, %p79
      %p82 = scmp.ne.s32.totalorder %s67, %s81
      %p83 = scmp.eq.s32.totalorder %s22, 0
      %p84 = por %p82, %p83
      %s85 = ssub.s32 %s23, %s35
      %p86 = scmp.eq.s32.totalorder %s85, 0
      %s88 = sadd.s32 %s87, 1
      %s89 = scalar_select %p86, %s87, %s88
      %p92 = pneg %p86
      %p93 = scmp.eq.s32.totalorder %s16, 7
      %p94 = por %p92, %p93
      %p95 = scmp.ne.s32.totalorder %s87, %s90
      %p96 = scmp.eq.s32.totalorder %s16, 0
      %p97 = por %p95, %p96
      %p98 = scmp.ne.s32.totalorder %s87, %s90
      %p99 = scmp.eq.s32.totalorder %s21, 7
      %p100 = por %p98, %p99
      %p101 = scmp.ne.s32.totalorder %s90, %s91
      %p102 = scmp.eq.s32.totalorder %s21, 0
      %p103 = por %p101, %p102
      %p104 = scmp.ne.s32.totalorder %s90, %s91
      %p105 = scmp.eq.s32.totalorder %s22, 7
      %p106 = por %p104, %p105
      %p108 = scmp.ne.s32.totalorder %s91, %s107
      %p109 = scmp.eq.s32.totalorder %s22, 0
      %p110 = por %p108, %p109
      %s111 = ssub.s32 %s23, %s35
      %p112 = scmp.eq.s32.totalorder %s111, 0
      %s114 = sadd.s32 %s113, 1
      %s115 = scalar_select %p112, %s113, %s114
      %p118 = pneg %p112
      %p119 = scmp.eq.s32.totalorder %s16, 7
      %p120 = por %p118, %p119
      %p121 = scmp.ne.s32.totalorder %s113, %s116
      %p122 = scmp.eq.s32.totalorder %s16, 0
      %p123 = por %p121, %p122
      %p124 = scmp.ne.s32.totalorder %s113, %s116
      %p125 = scmp.eq.s32.totalorder %s21, 7
      %p126 = por %p124, %p125
      %p127 = scmp.ne.s32.totalorder %s116, %s117
      %p128 = scmp.eq.s32.totalorder %s21, 0
      %p129 = por %p127, %p128
      %p130 = scmp.ne.s32.totalorder %s116, %s117
      %p131 = scmp.eq.s32.totalorder %s22, 7
      %p132 = por %p130, %p131
      %p134 = scmp.ne.s32.totalorder %s117, %s133
      %p135 = scmp.eq.s32.totalorder %s22, 0
      %p136 = por %p134, %p135
      %s137 = ssub.s32 %s23, %s35
      %p138 = scmp.eq.s32.totalorder %s137, 0
      %s140 = sadd.s32 %s139, 1
      %s141 = scalar_select %p138, %s139, %s140
      %p144 = pneg %p138
      %p145 = scmp.eq.s32.totalorder %s16, 7
      %p146 = por %p144, %p145
      %p147 = scmp.ne.s32.totalorder %s139, %s142
      %p148 = scmp.eq.s32.totalorder %s16, 0
      %p149 = por %p147, %p148
      %p150 = scmp.ne.s32.totalorder %s139, %s142
      %p151 = scmp.eq.s32.totalorder %s21, 7
      %p152 = por %p150, %p151
      %p153 = scmp.ne.s32.totalorder %s142, %s143
      %p154 = scmp.eq.s32.totalorder %s21, 0
      %p155 = por %p153, %p154
      %p156 = scmp.ne.s32.totalorder %s142, %s143
      %p157 = scmp.eq.s32.totalorder %s22, 7
      %p158 = por %p156, %p157
      %p160 = scmp.ne.s32.totalorder %s143, %s159
      %p161 = scmp.eq.s32.totalorder %s22, 0
      %p162 = por %p160, %p161
      %s164 = sadd.s32 %s163, 1
      %p167 = scmp.eq.s32.totalorder %s16, 7
      %p168 = scmp.ne.s32.totalorder %s163, %s165
      %p169 = scmp.eq.s32.totalorder %s16, 0
      %p170 = por %p168, %p169
      %p171 = scmp.ne.s32.totalorder %s163, %s165
      %p172 = scmp.eq.s32.totalorder %s21, 7
      %p173 = por %p171, %p172
      %p174 = scmp.ne.s32.totalorder %s165, %s166
      %p175 = scmp.eq.s32.totalorder %s21, 0
      %p176 = por %p174, %p175
      %p177 = scmp.ne.s32.totalorder %s165, %s166
      %p178 = scmp.eq.s32.totalorder %s22, 7
      %p179 = por %p177, %p178
      %p181 = scmp.ne.s32.totalorder %s166, %s180
      %p182 = scmp.eq.s32.totalorder %s22, 0
      %p183 = por %p181, %p182
      %s185 = sadd.s32 %s184, 1
      %p188 = scmp.eq.s32.totalorder %s16, 7
      %p189 = scmp.ne.s32.totalorder %s184, %s186
      %p190 = scmp.eq.s32.totalorder %s16, 0
      %p191 = por %p189, %p190
      %p192 = scmp.ne.s32.totalorder %s184, %s186
      %p193 = scmp.eq.s32.totalorder %s21, 7
      %p194 = por %p192, %p193
      %p195 = scmp.ne.s32.totalorder %s186, %s187
      %p196 = scmp.eq.s32.totalorder %s21, 0
      %p197 = por %p195, %p196
      %p198 = scmp.ne.s32.totalorder %s186, %s187
      %p199 = scmp.eq.s32.totalorder %s22, 7
      %p200 = por %p198, %p199
      %p202 = scmp.ne.s32.totalorder %s187, %s201
      %p203 = scmp.eq.s32.totalorder %s22, 0
      %p204 = por %p202, %p203
      %s206 = sadd.s32 %s205, 1
      %p209 = scmp.eq.s32.totalorder %s16, 7
      %p210 = scmp.ne.s32.totalorder %s205, %s207
      %p211 = scmp.eq.s32.totalorder %s16, 0
      %p212 = por %p210, %p211
      %p213 = scmp.ne.s32.totalorder %s205, %s207
      %p214 = scmp.eq.s32.totalorder %s21, 7
      %p215 = por %p213, %p214
      %p216 = scmp.ne.s32.totalorder %s207, %s208
      %p217 = scmp.eq.s32.totalorder %s21, 0
      %p218 = por %p216, %p217
      %p219 = scmp.ne.s32.totalorder %s207, %s208
      %p220 = scmp.eq.s32.totalorder %s22, 7
      %p221 = por %p219, %p220
      %p223 = scmp.ne.s32.totalorder %s208, %s222
      %p224 = scmp.eq.s32.totalorder %s22, 0
      %p225 = por %p223, %p224
      %s227 = sadd.s32 %s226, 1
      %p230 = scmp.eq.s32.totalorder %s16, 7
      %p231 = scmp.ne.s32.totalorder %s226, %s228
      %p232 = scmp.eq.s32.totalorder %s16, 0
      %p233 = por %p231, %p232
      %p234 = scmp.ne.s32.totalorder %s226, %s228
      %p235 = scmp.eq.s32.totalorder %s21, 7
      %p236 = por %p234, %p235
      %p237 = scmp.ne.s32.totalorder %s228, %s229
      %p238 = scmp.eq.s32.totalorder %s21, 0
      %p239 = por %p237, %p238
      %p240 = scmp.ne.s32.totalorder %s228, %s229
      %p241 = scmp.eq.s32.totalorder %s22, 7
      %p242 = por %p240, %p241
      %p244 = scmp.ne.s32.totalorder %s229, %s243
      %p245 = scmp.eq.s32.totalorder %s22, 0
      %p246 = por %p244, %p245
      %s248 = sadd.s32 %s247, 1
      %p251 = scmp.eq.s32.totalorder %s16, 7
      %p252 = scmp.ne.s32.totalorder %s247, %s249
      %p253 = scmp.eq.s32.totalorder %s16, 0
      %p254 = por %p252, %p253
      %p255 = scmp.ne.s32.totalorder %s247, %s249
      %p256 = scmp.eq.s32.totalorder %s21, 7
      %p257 = por %p255, %p256
      %p258 = scmp.ne.s32.totalorder %s249, %s250
      %p259 = scmp.eq.s32.totalorder %s21, 0
      %p260 = por %p258, %p259
      %p261 = scmp.ne.s32.totalorder %s249, %s250
      %p262 = scmp.eq.s32.totalorder %s22, 7
      %p263 = por %p261, %p262
      %p265 = scmp.ne.s32.totalorder %s250, %s264
      %p266 = scmp.eq.s32.totalorder %s22, 0
      %p267 = por %p265, %p266
      %s268 = ssub.s32 %s23, %s35
      %p269 = scmp.eq.s32.totalorder %s268, 0
      %s271 = sadd.s32 %s270, 1
      %s272 = scalar_select %p269, %s270, %s271
      %p275 = pneg %p269
      %p276 = scmp.eq.s32.totalorder %s16, 7
      %p277 = por %p275, %p276
      %p278 = scmp.ne.s32.totalorder %s270, %s273
      %p279 = scmp.eq.s32.totalorder %s16, 0
      %p280 = por %p278, %p279
      %p281 = scmp.ne.s32.totalorder %s270, %s273
      %p282 = scmp.eq.s32.totalorder %s21, 7
      %p283 = por %p281, %p282
      %p284 = scmp.ne.s32.totalorder %s273, %s274
      %p285 = scmp.eq.s32.totalorder %s21, 0
      %p286 = por %p284, %p285
      %p287 = scmp.ne.s32.totalorder %s273, %s274
      %p288 = scmp.eq.s32.totalorder %s22, 7
      %p289 = por %p287, %p288
      %p291 = scmp.ne.s32.totalorder %s274, %s290
      %p292 = scmp.eq.s32.totalorder %s22, 0
      %p293 = por %p291, %p292
      %p294 = scmp.le.s32.totalorder 1, %s16
      %p295 = scmp.lt.s32.totalorder %s16, 9
      %p296 = pnand %p294, %p295
      %p297 = pneg %p296
      // Predicated region
      $region9: #{tpu_custom_call.1} parent=5 // pred_check
        _
      $region10: #{tpu_custom_call.1} parent=5 // pred_check_branch
        %299 = sbr.rel (%p296) target = $region12
      $region11: #{tpu_custom_call.1} parent=5 // pred_region
        %s300 = ssub.s32 %s16, 1
        // Predicated region
        $region13: #{tpu_custom_call.1} parent=11 // pred_check
          %p301 = pneg %p77
        $region14: #{tpu_custom_call.1} parent=11 // pred_check_branch
          %303 = sbr.rel (%p301) target = $region16
        $region15: #{tpu_custom_call.1} parent=11 // pred_region
          _
        $region16: #{tpu_custom_call.1} parent=11 // pred_fallthru
          _
        // Predicated region
        $region17: #{tpu_custom_call.1} parent=11 // pred_check
          %p304 = pneg %p176
        $region18: #{tpu_custom_call.1} parent=11 // pred_check_branch
          %306 = sbr.rel (%p304) target = $region20
        $region19: #{tpu_custom_call.1} parent=11 // pred_region
          _
        $region20: #{tpu_custom_call.1} parent=11 // pred_fallthru
          _
        // Predicated region
        $region21: #{tpu_custom_call.1} parent=11 // pred_check
          %p307 = pneg %p197
        $region22: #{tpu_custom_call.1} parent=11 // pred_check_branch
          %309 = sbr.rel (%p307) target = $region24
        $region23: #{tpu_custom_call.1} parent=11 // pred_region
          _
        $region24: #{tpu_custom_call.1} parent=11 // pred_fallthru
          _
        // Predicated region
        $region25: #{tpu_custom_call.1} parent=11 // pred_check
          %p310 = pneg %p218
        $region26: #{tpu_custom_call.1} parent=11 // pred_check_branch
          %312 = sbr.rel (%p310) target = $region28
        $region27: #{tpu_custom_call.1} parent=11 // pred_region
          _
        $region28: #{tpu_custom_call.1} parent=11 // pred_fallthru
          _
        // Predicated region
        $region29: #{tpu_custom_call.1} parent=11 // pred_check
          %p313 = pneg %p239
        $region30: #{tpu_custom_call.1} parent=11 // pred_check_branch
          %315 = sbr.rel (%p313) target = $region32
        $region31: #{tpu_custom_call.1} parent=11 // pred_region
          _
        $region32: #{tpu_custom_call.1} parent=11 // pred_fallthru
          _
        // Predicated region
        $region33: #{tpu_custom_call.1} parent=11 // pred_check
          %p316 = pneg %p260
        $region34: #{tpu_custom_call.1} parent=11 // pred_check_branch
          %318 = sbr.rel (%p316) target = $region36
        $region35: #{tpu_custom_call.1} parent=11 // pred_region
          _
        $region36: #{tpu_custom_call.1} parent=11 // pred_fallthru
          _
      $region12: #{tpu_custom_call.1} parent=5 // pred_fallthru
        _
      %p319 = scmp.lt.s32.totalorder %s16, 8
      // Predicated region
      $region37: #{tpu_custom_call.1} parent=5 // pred_check
        %p320 = pneg %p319
      $region38: #{tpu_custom_call.1} parent=5 // pred_check_branch
        %322 = sbr.rel (%p320) target = $region40
      $region39: #{tpu_custom_call.1} parent=5 // pred_region
        // Predicated region
        $region41: #{tpu_custom_call.1} parent=39 // pred_check
          %p323 = pneg %p50
        $region42: #{tpu_custom_call.1} parent=39 // pred_check_branch
          %325 = sbr.rel (%p323) target = $region44
        $region43: #{tpu_custom_call.1} parent=39 // pred_region
          %s326 = sand.u32 %s40, 1
          %s327 = sand.u32 %s40, 1
          %s328 = smul.addr %s327, 64
          %s329 = scalar_lea.vmem [#allocation3], %s328
          %s330 = smul.u32 8, %s23
          %s331 = smul.addr %s330, 2
          %s332 = sadd.s32 %s24, %s331
          %s333 = smul.addr %s332, 8
          %s334 = scalar_lea.vmem %s0, %s333
          // Predicated region
          $region45: #{tpu_custom_call.1} parent=43 // pred_check
            _
          $region46: #{tpu_custom_call.1} parent=43 // pred_check_branch
            %336 = sbr.rel (0) target = $region48
          $region47: #{tpu_custom_call.1} parent=43 // pred_region
            // Predicated region
            $region49: #{tpu_custom_call.1} parent=47 // pred_check
              _
            $region50: #{tpu_custom_call.1} parent=47 // pred_check_branch
              %338 = sbr.rel (0) target = $region52
            $region51: #{tpu_custom_call.1} parent=47 // pred_region
              // Predicated region
              $region64: #{tpu_custom_call.1} parent=51 // pred_check
                _
              $region65: #{tpu_custom_call.1} parent=51 // pred_check_branch
                %368 = sbr.rel (0) target = $region67
              $region66: #{tpu_custom_call.1} parent=51 // pred_region
                loop: start=0, step=1, limit=1
                $region68: #{tpu_custom_call.1} parent=66 // loop_pre_header
                  _
                $region69: #{tpu_custom_call.1} parent=66 // loop_header
                  %s370 = sphi 0, %s374
                  %p371 = scmp.ge.s32.totalorder %s370, 1
                  %s375 = sphi %s334, %s334
                  %s376 = sphi %s329, %s329
                $region70: #{tpu_custom_call.1} parent=66 // loop_header_branch
                  %373 = sbr.rel (%p371) target = $region74
                $region71: #{tpu_custom_call.1} parent=66 // loop_body
                  %v377 = vld [vmem:[%s375] sm:$0xff]
                  %378 = vst [vmem:[%s376] sm:$0xff] %v377
                  %v379 = vld [vmem:[%s375 + $0x10] sm:$0xff]
                  %380 = vst [vmem:[%s376 + $0x8] sm:$0xff] %v379
                  %v381 = vld [vmem:[%s375 + $0x20] sm:$0xff]
                  %382 = vst [vmem:[%s376 + $0x10] sm:$0xff] %v381
                  %v383 = vld [vmem:[%s375 + $0x30] sm:$0xff]
                  %384 = vst [vmem:[%s376 + $0x18] sm:$0xff] %v383
                  %v385 = vld [vmem:[%s375 + $0x40] sm:$0xff]
                  %386 = vst [vmem:[%s376 + $0x20] sm:$0xff] %v385
                  %v387 = vld [vmem:[%s375 + $0x50] sm:$0xff]
                  %388 = vst [vmem:[%s376 + $0x28] sm:$0xff] %v387
                  %v389 = vld [vmem:[%s375 + $0x60] sm:$0xff]
                  %390 = vst [vmem:[%s376 + $0x30] sm:$0xff] %v389
                  %v391 = vld [vmem:[%s375 + $0x70] sm:$0xff]
                  %392 = vst [vmem:[%s376 + $0x38] sm:$0xff] %v391
                $region72: #{tpu_custom_call.1} parent=66 // loop_footer
                  %s374 = sadd.s32 1, %s370
                $region73: #{tpu_custom_call.1} parent=66 // loop_footer_branch
                  %369 = sbr.rel target = $region69
                $region74: #{tpu_custom_call.1} parent=66 // loop_exit
                  _
              $region67: #{tpu_custom_call.1} parent=51 // pred_fallthru
                _
              // Predicated region
              $region75: #{tpu_custom_call.1} parent=51 // pred_check
                _
              $region76: #{tpu_custom_call.1} parent=51 // pred_check_branch
                %394 = sbr.rel target = $region78
              $region77: #{tpu_custom_call.1} parent=51 // pred_region
                _
              $region78: #{tpu_custom_call.1} parent=51 // pred_fallthru
                _
            $region52: #{tpu_custom_call.1} parent=47 // pred_fallthru
              _
            // Predicated region
            $region53: #{tpu_custom_call.1} parent=47 // pred_check
              _
            $region54: #{tpu_custom_call.1} parent=47 // pred_check_branch
              %340 = sbr.rel target = $region56
            $region55: #{tpu_custom_call.1} parent=47 // pred_region
              %s342 = ssub.s32 256, 1
              loop: start=0, step=1, limit=1
              $region57: #{tpu_custom_call.1} parent=55 // loop_pre_header
                _
              $region58: #{tpu_custom_call.1} parent=55 // loop_header
                %s344 = sphi 0, %s348
                %p345 = scmp.ge.s32.totalorder %s344, 1
                %s349 = sphi %s334, %s334
                %s350 = sphi %s329, %s329
              $region59: #{tpu_custom_call.1} parent=55 // loop_header_branch
                %347 = sbr.rel (%p345) target = $region63
              $region60: #{tpu_custom_call.1} parent=55 // loop_body
                %v351 = vld [vmem:[%s349] sm:%s342]
                %352 = vst [vmem:[%s350] sm:%s342] %v351
                %v353 = vld [vmem:[%s349 + $0x10] sm:%s342]
                %354 = vst [vmem:[%s350 + $0x8] sm:%s342] %v353
                %v355 = vld [vmem:[%s349 + $0x20] sm:%s342]
                %356 = vst [vmem:[%s350 + $0x10] sm:%s342] %v355
                %v357 = vld [vmem:[%s349 + $0x30] sm:%s342]
                %358 = vst [vmem:[%s350 + $0x18] sm:%s342] %v357
                %v359 = vld [vmem:[%s349 + $0x40] sm:%s342]
                %360 = vst [vmem:[%s350 + $0x20] sm:%s342] %v359
                %v361 = vld [vmem:[%s349 + $0x50] sm:%s342]
                %362 = vst [vmem:[%s350 + $0x28] sm:%s342] %v361
                %v363 = vld [vmem:[%s349 + $0x60] sm:%s342]
                %364 = vst [vmem:[%s350 + $0x30] sm:%s342] %v363
                %v365 = vld [vmem:[%s349 + $0x70] sm:%s342]
                %366 = vst [vmem:[%s350 + $0x38] sm:%s342] %v365
              $region61: #{tpu_custom_call.1} parent=55 // loop_footer
                %s348 = sadd.s32 1, %s344
              $region62: #{tpu_custom_call.1} parent=55 // loop_footer_branch
                %343 = sbr.rel target = $region58
              $region63: #{tpu_custom_call.1} parent=55 // loop_exit
                _
            $region56: #{tpu_custom_call.1} parent=47 // pred_fallthru
              _
          $region48: #{tpu_custom_call.1} parent=43 // pred_fallthru
            _
          %395 = vnop
        $region44: #{tpu_custom_call.1} parent=39 // pred_fallthru
          _
        // Predicated region
        $region79: #{tpu_custom_call.1} parent=39 // pred_check
          %p396 = pneg %p97
        $region80: #{tpu_custom_call.1} parent=39 // pred_check_branch
          %398 = sbr.rel (%p396) target = $region82
        $region81: #{tpu_custom_call.1} parent=39 // pred_region
          %s399 = smul.u32 8, %s23
          %p400 = scmp.lt.s32.totalorder %s399, 31
          %s401 = scalar_select %p400, %s399, 31
          %s402 = smul.addr %s401, 8
          %s403 = scalar_lea.vmem %s2, %s402
          %s404 = smul.u32 8, %s23
        $region82: #{tpu_custom_call.1} parent=39 // pred_fallthru
          _
        // Predicated region
        $region83: #{tpu_custom_call.1} parent=39 // pred_check
          %p405 = pneg %p123
        $region84: #{tpu_custom_call.1} parent=39 // pred_check_branch
          %407 = sbr.rel (%p405) target = $region86
        $region85: #{tpu_custom_call.1} parent=39 // pred_region
          %s408 = smul.u32 8, %s23
          %p409 = scmp.lt.s32.totalorder %s408, 31
          %s410 = scalar_select %p409, %s408, 31
          %s411 = smul.addr %s410, 8
          %s412 = scalar_lea.vmem %s3, %s411
          %s413 = smul.u32 8, %s23
        $region86: #{tpu_custom_call.1} parent=39 // pred_fallthru
          _
        // Predicated region
        $region87: #{tpu_custom_call.1} parent=39 // pred_check
          %p414 = pneg %p149
        $region88: #{tpu_custom_call.1} parent=39 // pred_check_branch
          %416 = sbr.rel (%p414) target = $region90
        $region89: #{tpu_custom_call.1} parent=39 // pred_region
          %s417 = smul.u32 8, %s23
          %p418 = scmp.lt.s32.totalorder %s417, 31
          %s419 = scalar_select %p418, %s417, 31
          %s420 = smul.addr %s419, 8
          %s421 = scalar_lea.vmem %s4, %s420
          %s422 = smul.u32 8, %s23
        $region90: #{tpu_custom_call.1} parent=39 // pred_fallthru
          _
      $region40: #{tpu_custom_call.1} parent=5 // pred_fallthru
        _
      %p423 = scmp.le.s32.totalorder 1, %s16
      %p424 = scmp.lt.s32.totalorder %s16, 9
      %p425 = pnand %p423, %p424
      %p426 = pneg %p425
      // Predicated region
      $region91: #{tpu_custom_call.1} parent=5 // pred_check
        _
      $region92: #{tpu_custom_call.1} parent=5 // pred_check_branch
        %428 = sbr.rel (%p425) target = $region94
      $region93: #{tpu_custom_call.1} parent=5 // pred_region
        %s429 = ssub.s32 %s16, 1
        %s430 = sand.u32 %s43, 1
        %s431 = sand.u32 %s43, 1
        %s432 = smul.addr %s431, 64
        %s433 = scalar_lea.vmem [#allocation3], %s432
        // Predicated region
        $region95: #{tpu_custom_call.1} parent=93 // pred_check
          %p434 = pneg %p56
        $region96: #{tpu_custom_call.1} parent=93 // pred_check_branch
          %436 = sbr.rel (%p434) target = $region98
        $region97: #{tpu_custom_call.1} parent=93 // pred_region
          _
        $region98: #{tpu_custom_call.1} parent=93 // pred_fallthru
          _
        %s437 = sand.u32 %s43, 1
        %s438 = sand.u32 %s43, 1
        %s439 = smul.addr %s438, 64
        %s440 = scalar_lea.vmem [#allocation3], %s439
        %p441 = pneg %p56
        %p442 = pneg %p53
        %p443 = pneg %p77
        %p444 = pneg %p74
        %s445 = smul.u32 8, %s25
        %p446 = scmp.lt.s32.totalorder %s445, 31
        %s447 = scalar_select %p446, %s445, 31
        %s448 = smul.addr %s447, 8
        %s449 = scalar_lea.vmem %s2, %s448
        %p450 = pneg %p103
        %p451 = pneg %p100
        %s452 = smul.u32 8, %s25
        %p453 = scmp.lt.s32.totalorder %s452, 31
        %s454 = scalar_select %p453, %s452, 31
        %s455 = smul.addr %s454, 8
        %s456 = scalar_lea.vmem %s3, %s455
        %p457 = pneg %p129
        %p458 = pneg %p126
        %s459 = smul.u32 8, %s25
        %p460 = scmp.lt.s32.totalorder %s459, 31
        %s461 = scalar_select %p460, %s459, 31
        %s462 = smul.addr %s461, 8
        %s463 = scalar_lea.vmem %s4, %s462
        %p464 = pneg %p155
        %p465 = pneg %p152
        %p466 = pneg %p176
        %p467 = pneg %p173
        %p468 = pneg %p197
        %p469 = pneg %p194
        %p470 = pneg %p218
        %p471 = pneg %p215
        %p472 = pneg %p239
        %p473 = pneg %p236
        %p474 = pneg %p260
        %p475 = pneg %p257
        %p476 = pneg %p286
        %p477 = pneg %p283
        %s478 = smul.u32 8, %s25
        %p479 = scmp.lt.s32.totalorder %s478, 31
        %s480 = scalar_select %p479, %s478, 31
        %s481 = smul.addr %s480, 8
        %s482 = scalar_lea.vmem %s10, %s481
        %s483 = smul.u32 8, %s25
        %s484 = smul.u32 8, %s25
        %p485 = scmp.lt.s32.totalorder %s484, 31
        %s486 = scalar_select %p485, %s484, 31
        %s487 = smul.addr %s486, 8
        %s488 = scalar_lea.vmem %s2, %s487
        %s489 = smul.u32 8, %s25
        %s490 = smul.u32 8, %s25
        %p491 = scmp.lt.s32.totalorder %s490, 31
        %s492 = scalar_select %p491, %s490, 31
        %s493 = smul.addr %s492, 8
        %s494 = scalar_lea.vmem %s3, %s493
        %s495 = smul.u32 8, %s25
        %s496 = smul.u32 8, %s25
        %p497 = scmp.lt.s32.totalorder %s496, 31
        %s498 = scalar_select %p497, %s496, 31
        %s499 = smul.addr %s498, 8
        %s500 = scalar_lea.vmem %s4, %s499
        %s501 = smul.u32 8, %s25
        %s502 = smul.u32 8, %s25
        %p503 = scmp.lt.s32.totalorder %s502, 31
        %s504 = scalar_select %p503, %s502, 31
        %s505 = smul.addr %s504, 8
        %s506 = scalar_lea.vmem %s10, %s505
        %s507 = smul.u32 8, %s25
        %p508 = scmp.eq.s32.totalorder %s26, 0
        // Predicated region
        $region99: #{tpu_custom_call.1} parent=93 // pred_check
          %p509 = pneg %p508
        $region100: #{tpu_custom_call.1} parent=93 // pred_check_branch
          %511 = sbr.rel (%p509) target = $region102
        $region101: #{tpu_custom_call.1} parent=93 // pred_region
          %vm512 = vcmask 261120
          %513 = vst.msk [vmem:[#allocation2] sm:$0xff] %vm512, 0.0
          %514 = vst.msk [vmem:[#allocation2 + $0x8] sm:$0xff] %vm512, 0.0
          %515 = vst.msk [vmem:[#allocation2 + $0x10] sm:$0xff] %vm512, 0.0
          %516 = vst.msk [vmem:[#allocation2 + $0x18] sm:$0xff] %vm512, 0.0
          %517 = vst.msk [vmem:[#allocation2 + $0x20] sm:$0xff] %vm512, 0.0
          %518 = vst.msk [vmem:[#allocation2 + $0x28] sm:$0xff] %vm512, 0.0
          %519 = vst.msk [vmem:[#allocation2 + $0x30] sm:$0xff] %vm512, 0.0
          %520 = vst.msk [vmem:[#allocation2 + $0x38] sm:$0xff] %vm512, 0.0
        $region102: #{tpu_custom_call.1} parent=93 // pred_fallthru
          _
        %v521 = vld [vmem:[%s433] sm:$0xff]
        %v522 = vld [vmem:[%s433 + $0x8] sm:$0xff]
        %v523 = vld [vmem:[%s433 + $0x10] sm:$0xff]
        %v524 = vld [vmem:[%s433 + $0x18] sm:$0xff]
        %v525 = vld [vmem:[%s433 + $0x20] sm:$0xff]
        %v526 = vld [vmem:[%s433 + $0x28] sm:$0xff]
        %v527 = vld [vmem:[%s433 + $0x30] sm:$0xff]
        %v528 = vld [vmem:[%s433 + $0x38] sm:$0xff]
        %s529 = smul.u32 %s26, 128
        %s530 = scalar_lea.vmem %s1, %s529
        %v531 = vld [vmem:[%s530] sm:$0xff]
        %v532 = vld [vmem:[%s530 + $0x8] sm:$0xff]
        %v533 = vld [vmem:[%s530 + $0x10] sm:$0xff]
        %v534 = vld [vmem:[%s530 + $0x18] sm:$0xff]
        %v535 = vld [vmem:[%s530 + $0x20] sm:$0xff]
        %v536 = vld [vmem:[%s530 + $0x28] sm:$0xff]
        %v537 = vld [vmem:[%s530 + $0x30] sm:$0xff]
        %v538 = vld [vmem:[%s530 + $0x38] sm:$0xff]
        %v539 = vld [vmem:[%s530 + $0x40] sm:$0xff]
        %v540 = vld [vmem:[%s530 + $0x48] sm:$0xff]
        %v541 = vld [vmem:[%s530 + $0x50] sm:$0xff]
        %v542 = vld [vmem:[%s530 + $0x58] sm:$0xff]
        %v543 = vld [vmem:[%s530 + $0x60] sm:$0xff]
        %v544 = vld [vmem:[%s530 + $0x68] sm:$0xff]
        %v545 = vld [vmem:[%s530 + $0x70] sm:$0xff]
        %v546 = vld [vmem:[%s530 + $0x78] sm:$0xff]
        %v547 = vld [vmem:[#allocation2] sm:$0xff]
        %v548 = vld [vmem:[#allocation2 + $0x8] sm:$0xff]
        %v549 = vld [vmem:[#allocation2 + $0x10] sm:$0xff]
        %v550 = vld [vmem:[#allocation2 + $0x18] sm:$0xff]
        %v551 = vld [vmem:[#allocation2 + $0x20] sm:$0xff]
        %v552 = vld [vmem:[#allocation2 + $0x28] sm:$0xff]
        %v553 = vld [vmem:[#allocation2 + $0x30] sm:$0xff]
        %v554 = vld [vmem:[#allocation2 + $0x38] sm:$0xff]
        %555 = vmatprep.subr.mxu0 0.0
        %556 = vmatpush1.msra.mxu0 %v546
        %557 = vmatprep.subr.mxu0 0.0
        %558 = vmatpush1.msra.mxu0 %v545
        %559 = vmatprep.subr.mxu0 0.0
        %560 = vmatpush1.msra.mxu0 %v544
        %561 = vmatprep.subr.mxu0 0.0
        %562 = vmatpush1.msra.mxu0 %v543
        %563 = vmatprep.subr.mxu0 0.0
        %564 = vmatpush1.msra.mxu0 %v542
        %565 = vmatprep.subr.mxu0 0.0
        %566 = vmatpush1.msra.mxu0 %v541
        %567 = vmatprep.subr.mxu0 0.0
        %568 = vmatpush1.msra.mxu0 %v540
        %569 = vmatprep.subr.mxu0 0.0
        %570 = vmatpush1.msra.mxu0 %v539
        %571 = vmatprep.subr.mxu0 0.0
        %572 = vmatpush1.msra.mxu0 %v538
        %573 = vmatprep.subr.mxu0 0.0
        %574 = vmatpush1.msra.mxu0 %v537
        %575 = vmatprep.subr.mxu0 0.0
        %576 = vmatpush1.msra.mxu0 %v536
        %577 = vmatprep.subr.mxu0 0.0
        %578 = vmatpush1.msra.mxu0 %v535
        %579 = vmatprep.subr.mxu0 0.0
        %580 = vmatpush1.msra.mxu0 %v534
        %581 = vmatprep.subr.mxu0 0.0
        %582 = vmatpush1.msra.mxu0 %v533
        %583 = vmatprep.subr.mxu0 0.0
        %584 = vmatpush1.msra.mxu0 %v532
        %585 = vmatprep.subr.mxu0 0.0
        %586 = vmatpush1.msra.mxu0 %v531
        %587 = vmatprep.subr.mxu0 0.0
        %588 = vmatpush2.msra.mxu0 0.0
        %589 = vmatprep.subr.mxu0 0.0
        %590 = vmatpush2.msra.mxu0 0.0
        %591 = vmatprep.subr.mxu0 0.0
        %592 = vmatpush2.msra.mxu0 0.0
        %593 = vmatprep.subr.mxu0 0.0
        %594 = vmatpush2.msra.mxu0 0.0
        %595 = vmatprep.subr.mxu0 0.0
        %596 = vmatpush2.msra.mxu0 0.0
        %597 = vmatprep.subr.mxu0 0.0
        %598 = vmatpush2.msra.mxu0 0.0
        %599 = vmatprep.subr.mxu0 0.0
        %600 = vmatpush2.msra.mxu0 0.0
        %601 = vmatprep.subr.mxu0 0.0
        %602 = vmatpush2.msra.mxu0 0.0
        %603 = vmatprep.subr.mxu0 0.0
        %604 = vmatpush2.msra.mxu0 0.0
        %605 = vmatprep.subr.mxu0 0.0
        %606 = vmatpush2.msra.mxu0 0.0
        %607 = vmatprep.subr.mxu0 0.0
        %608 = vmatpush2.msra.mxu0 0.0
        %609 = vmatprep.subr.mxu0 0.0
        %610 = vmatpush2.msra.mxu0 0.0
        %611 = vmatprep.subr.mxu0 0.0
        %612 = vmatpush2.msra.mxu0 0.0
        %613 = vmatprep.subr.mxu0 0.0
        %614 = vmatpush2.msra.mxu0 0.0
        %615 = vmatprep.subr.mxu0 0.0
        %616 = vmatpush2.msra.mxu0 0.0
        %617 = vmatprep.subr.mxu0 0.0
        %618 = vmatpush2.msra.mxu0 0.0
        %619 = vmatprep.mubr.f32.mxu0 0.0
        %620 = vmatmul.mubr.f32.gmra.mxu0 %v521
        %v621 = vpop.f32.mrf.mxu0
        %v622 = vadd.f32 0.0, %v621
        %v623 = vpop.f32.mrf.mxu0
        %624 = vmatprep.mubr.f32.mxu0 0.0
        %625 = vmatmul.mubr.f32.gmra.mxu0 %v522
        %v626 = vpop.f32.mrf.mxu0
        %v627 = vadd.f32 0.0, %v626
        %v628 = vpop.f32.mrf.mxu0
        %629 = vmatprep.mubr.f32.mxu0 0.0
        %630 = vmatmul.mubr.f32.gmra.mxu0 %v523
        %v631 = vpop.f32.mrf.mxu0
        %v632 = vadd.f32 0.0, %v631
        %v633 = vpop.f32.mrf.mxu0
        %634 = vmatprep.mubr.f32.mxu0 0.0
        %635 = vmatmul.mubr.f32.gmra.mxu0 %v524
        %v636 = vpop.f32.mrf.mxu0
        %v637 = vadd.f32 0.0, %v636
        %v638 = vpop.f32.mrf.mxu0
        %639 = vmatprep.mubr.f32.mxu0 0.0
        %640 = vmatmul.mubr.f32.gmra.mxu0 %v525
        %v641 = vpop.f32.mrf.mxu0
        %v642 = vadd.f32 0.0, %v641
        %v643 = vpop.f32.mrf.mxu0
        %644 = vmatprep.mubr.f32.mxu0 0.0
        %645 = vmatmul.mubr.f32.gmra.mxu0 %v526
        %v646 = vpop.f32.mrf.mxu0
        %v647 = vadd.f32 0.0, %v646
        %v648 = vpop.f32.mrf.mxu0
        %649 = vmatprep.mubr.f32.mxu0 0.0
        %650 = vmatmul.mubr.f32.gmra.mxu0 %v527
        %v651 = vpop.f32.mrf.mxu0
        %v652 = vadd.f32 0.0, %v651
        %v653 = vpop.f32.mrf.mxu0
        %654 = vmatprep.mubr.f32.mxu0 0.0
        %655 = vmatmul.mubr.f32.gmra.mxu0 %v528
        %v656 = vpop.f32.mrf.mxu0
        %v657 = vadd.f32 0.0, %v656
        %v658 = vpop.f32.mrf.mxu0
        %659 = vdwg.mxu0
        %v660 = vadd.f32 %v547, %v622
        %v661 = vadd.f32 %v548, %v627
        %v662 = vadd.f32 %v549, %v632
        %v663 = vadd.f32 %v550, %v637
        %v664 = vadd.f32 %v551, %v642
        %v665 = vadd.f32 %v552, %v647
        %v666 = vadd.f32 %v553, %v652
        %v667 = vadd.f32 %v554, %v657
        %vm668 = vcmask 261120
        %669 = vst.msk [vmem:[#allocation2] sm:$0xff] %vm668, %v660
        %670 = vst.msk [vmem:[#allocation2 + $0x8] sm:$0xff] %vm668, %v661
        %671 = vst.msk [vmem:[#allocation2 + $0x10] sm:$0xff] %vm668, %v662
        %672 = vst.msk [vmem:[#allocation2 + $0x18] sm:$0xff] %vm668, %v663
        %673 = vst.msk [vmem:[#allocation2 + $0x20] sm:$0xff] %vm668, %v664
        %674 = vst.msk [vmem:[#allocation2 + $0x28] sm:$0xff] %vm668, %v665
        %675 = vst.msk [vmem:[#allocation2 + $0x30] sm:$0xff] %vm668, %v666
        %676 = vst.msk [vmem:[#allocation2 + $0x38] sm:$0xff] %vm668, %v667
        %p677 = scmp.eq.s32.totalorder %s26, 1
        // Predicated region
        $region103: #{tpu_custom_call.1} parent=93 // pred_check
          %p678 = pneg %p677
        $region104: #{tpu_custom_call.1} parent=93 // pred_check_branch
          %680 = sbr.rel (%p678) target = $region106
        $region105: #{tpu_custom_call.1} parent=93 // pred_region
          %v681 = vld [vmem:[%s488] sm:$0xff]
          %v682 = vld [vmem:[%s488 + $0x8] sm:$0xff]
          %v683 = vld [vmem:[%s488 + $0x10] sm:$0xff]
          %v684 = vld [vmem:[%s488 + $0x18] sm:$0xff]
          %v685 = vld [vmem:[%s488 + $0x20] sm:$0xff]
          %v686 = vld [vmem:[%s488 + $0x28] sm:$0xff]
          %v687 = vld [vmem:[%s488 + $0x30] sm:$0xff]
          %v688 = vld [vmem:[%s488 + $0x38] sm:$0xff]
          %v689 = vld [vmem:[#allocation2] sm:$0xff]
          %v690 = vld [vmem:[#allocation2 + $0x8] sm:$0xff]
          %v691 = vld [vmem:[#allocation2 + $0x10] sm:$0xff]
          %v692 = vld [vmem:[#allocation2 + $0x18] sm:$0xff]
          %v693 = vld [vmem:[#allocation2 + $0x20] sm:$0xff]
          %v694 = vld [vmem:[#allocation2 + $0x28] sm:$0xff]
          %v695 = vld [vmem:[#allocation2 + $0x30] sm:$0xff]
          %v696 = vld [vmem:[#allocation2 + $0x38] sm:$0xff]
          %v697 = vld [vmem:[%s494] sm:$0xff]
          %v698 = vld [vmem:[%s494 + $0x8] sm:$0xff]
          %v699 = vld [vmem:[%s494 + $0x10] sm:$0xff]
          %v700 = vld [vmem:[%s494 + $0x18] sm:$0xff]
          %v701 = vld [vmem:[%s494 + $0x20] sm:$0xff]
          %v702 = vld [vmem:[%s494 + $0x28] sm:$0xff]
          %v703 = vld [vmem:[%s494 + $0x30] sm:$0xff]
          %v704 = vld [vmem:[%s494 + $0x38] sm:$0xff]
          %706 = vset.pattern.permute.xlu0 0
          %707 = vperm.xlu0 %706, %v697
          %v708 = vpop.permute.xlu0 %707
          %711 = vset.pattern.permute.xlu0 0
          %712 = vperm.xlu0 %711, %v698
          %v713 = vpop.permute.xlu0 %712
          %716 = vset.pattern.permute.xlu0 0
          %717 = vperm.xlu0 %716, %v699
          %v718 = vpop.permute.xlu0 %717
          %721 = vset.pattern.permute.xlu0 0
          %722 = vperm.xlu0 %721, %v700
          %v723 = vpop.permute.xlu0 %722
          %726 = vset.pattern.permute.xlu0 0
          %727 = vperm.xlu0 %726, %v701
          %v728 = vpop.permute.xlu0 %727
          %731 = vset.pattern.permute.xlu0 0
          %732 = vperm.xlu0 %731, %v702
          %v733 = vpop.permute.xlu0 %732
          %736 = vset.pattern.permute.xlu0 0
          %737 = vperm.xlu0 %736, %v703
          %v738 = vpop.permute.xlu0 %737
          %741 = vset.pattern.permute.xlu0 0
          %742 = vperm.xlu0 %741, %v704
          %v743 = vpop.permute.xlu0 %742
          %v745 = vmul.f32 %v689, %v708
          %v746 = vmul.f32 %v690, %v713
          %v747 = vmul.f32 %v691, %v718
          %v748 = vmul.f32 %v692, %v723
          %v749 = vmul.f32 %v693, %v728
          %v750 = vmul.f32 %v694, %v733
          %v751 = vmul.f32 %v695, %v738
          %v752 = vmul.f32 %v696, %v743
          %v753 = vld [vmem:[%s500] sm:$0xff]
          %v754 = vld [vmem:[%s500 + $0x8] sm:$0xff]
          %v755 = vld [vmem:[%s500 + $0x10] sm:$0xff]
          %v756 = vld [vmem:[%s500 + $0x18] sm:$0xff]
          %v757 = vld [vmem:[%s500 + $0x20] sm:$0xff]
          %v758 = vld [vmem:[%s500 + $0x28] sm:$0xff]
          %v759 = vld [vmem:[%s500 + $0x30] sm:$0xff]
          %v760 = vld [vmem:[%s500 + $0x38] sm:$0xff]
          %v761 = vld [vmem:[%s5] sm:$0xff]
          %v762 = vld [vmem:[%s5 + $0x8] sm:$0xff]
          %v763 = vld [vmem:[%s5 + $0x10] sm:$0xff]
          %v764 = vld [vmem:[%s5 + $0x18] sm:$0xff]
          %v765 = vld [vmem:[%s5 + $0x20] sm:$0xff]
          %v766 = vld [vmem:[%s5 + $0x28] sm:$0xff]
          %v767 = vld [vmem:[%s5 + $0x30] sm:$0xff]
          %v768 = vld [vmem:[%s5 + $0x38] sm:$0xff]
          %vm769 = vcmask 523264
          %v771 = vsel %vm769, %v753, 0
          %v774 = vsel %vm769, %v754, 0
          %v777 = vsel %vm769, %v755, 0
          %v780 = vsel %vm769, %v756, 0
          %v783 = vsel %vm769, %v757, 0
          %v786 = vsel %vm769, %v758, 0
          %v789 = vsel %vm769, %v759, 0
          %v792 = vsel %vm769, %v760, 0
          %794 = vmatprep.subr.mxu0 0.0
          %795 = vmatpush1.msra.mxu0 0.0
          %796 = vmatprep.subr.mxu0 0.0
          %797 = vmatpush1.msra.mxu0 0.0
          %798 = vmatprep.subr.mxu0 0.0
          %799 = vmatpush1.msra.mxu0 0.0
          %800 = vmatprep.subr.mxu0 0.0
          %801 = vmatpush1.msra.mxu0 0.0
          %802 = vmatprep.subr.mxu0 0.0
          %803 = vmatpush1.msra.mxu0 0.0
          %804 = vmatprep.subr.mxu0 0.0
          %805 = vmatpush1.msra.mxu0 0.0
          %806 = vmatprep.subr.mxu0 0.0
          %807 = vmatpush1.msra.mxu0 0.0
          %808 = vmatprep.subr.mxu0 0.0
          %809 = vmatpush1.msra.mxu0 0.0
          %810 = vmatprep.subr.mxu0 0.0
          %811 = vmatpush1.msra.mxu0 %v768
          %812 = vmatprep.subr.mxu0 0.0
          %813 = vmatpush1.msra.mxu0 %v767
          %814 = vmatprep.subr.mxu0 0.0
          %815 = vmatpush1.msra.mxu0 %v766
          %816 = vmatprep.subr.mxu0 0.0
          %817 = vmatpush1.msra.mxu0 %v765
          %818 = vmatprep.subr.mxu0 0.0
          %819 = vmatpush1.msra.mxu0 %v764
          %820 = vmatprep.subr.mxu0 0.0
          %821 = vmatpush1.msra.mxu0 %v763
          %822 = vmatprep.subr.mxu0 0.0
          %823 = vmatpush1.msra.mxu0 %v762
          %824 = vmatprep.subr.mxu0 0.0
          %825 = vmatpush1.msra.mxu0 %v761
          %826 = vmatprep.subr.mxu0 0.0
          %827 = vmatpush2.msra.mxu0 0.0
          %828 = vmatprep.subr.mxu0 0.0
          %829 = vmatpush2.msra.mxu0 0.0
          %830 = vmatprep.subr.mxu0 0.0
          %831 = vmatpush2.msra.mxu0 0.0
          %832 = vmatprep.subr.mxu0 0.0
          %833 = vmatpush2.msra.mxu0 0.0
          %834 = vmatprep.subr.mxu0 0.0
          %835 = vmatpush2.msra.mxu0 0.0
          %836 = vmatprep.subr.mxu0 0.0
          %837 = vmatpush2.msra.mxu0 0.0
          %838 = vmatprep.subr.mxu0 0.0
          %839 = vmatpush2.msra.mxu0 0.0
          %840 = vmatprep.subr.mxu0 0.0
          %841 = vmatpush2.msra.mxu0 0.0
          %842 = vmatprep.subr.mxu0 0.0
          %843 = vmatpush2.msra.mxu0 0.0
          %844 = vmatprep.subr.mxu0 0.0
          %845 = vmatpush2.msra.mxu0 0.0
          %846 = vmatprep.subr.mxu0 0.0
          %847 = vmatpush2.msra.mxu0 0.0
          %848 = vmatprep.subr.mxu0 0.0
          %849 = vmatpush2.msra.mxu0 0.0
          %850 = vmatprep.subr.mxu0 0.0
          %851 = vmatpush2.msra.mxu0 0.0
          %852 = vmatprep.subr.mxu0 0.0
          %853 = vmatpush2.msra.mxu0 0.0
          %854 = vmatprep.subr.mxu0 0.0
          %855 = vmatpush2.msra.mxu0 0.0
          %856 = vmatprep.subr.mxu0 0.0
          %857 = vmatpush2.msra.mxu0 0.0
          %858 = vmatprep.mubr.f32.mxu0 0.0
          %859 = vmatmul.mubr.f32.gmra.mxu0 %v771
          %v860 = vpop.f32.mrf.mxu0
          %v861 = vadd.f32 0.0, %v860
          %v862 = vpop.f32.mrf.mxu0
          %863 = vmatprep.mubr.f32.mxu0 0.0
          %864 = vmatmul.mubr.f32.gmra.mxu0 %v774
          %v865 = vpop.f32.mrf.mxu0
          %v866 = vadd.f32 0.0, %v865
          %v867 = vpop.f32.mrf.mxu0
          %868 = vmatprep.mubr.f32.mxu0 0.0
          %869 = vmatmul.mubr.f32.gmra.mxu0 %v777
          %v870 = vpop.f32.mrf.mxu0
          %v871 = vadd.f32 0.0, %v870
          %v872 = vpop.f32.mrf.mxu0
          %873 = vmatprep.mubr.f32.mxu0 0.0
          %874 = vmatmul.mubr.f32.gmra.mxu0 %v780
          %v875 = vpop.f32.mrf.mxu0
          %v876 = vadd.f32 0.0, %v875
          %v877 = vpop.f32.mrf.mxu0
          %878 = vmatprep.mubr.f32.mxu0 0.0
          %879 = vmatmul.mubr.f32.gmra.mxu0 %v783
          %v880 = vpop.f32.mrf.mxu0
          %v881 = vadd.f32 0.0, %v880
          %v882 = vpop.f32.mrf.mxu0
          %883 = vmatprep.mubr.f32.mxu0 0.0
          %884 = vmatmul.mubr.f32.gmra.mxu0 %v786
          %v885 = vpop.f32.mrf.mxu0
          %v886 = vadd.f32 0.0, %v885
          %v887 = vpop.f32.mrf.mxu0
          %888 = vmatprep.mubr.f32.mxu0 0.0
          %889 = vmatmul.mubr.f32.gmra.mxu0 %v789
          %v890 = vpop.f32.mrf.mxu0
          %v891 = vadd.f32 0.0, %v890
          %v892 = vpop.f32.mrf.mxu0
          %893 = vmatprep.mubr.f32.mxu0 0.0
          %894 = vmatmul.mubr.f32.gmra.mxu0 %v792
          %v895 = vpop.f32.mrf.mxu0
          %v896 = vadd.f32 0.0, %v895
          %v897 = vpop.f32.mrf.mxu0
          %898 = vdwg.mxu0
          %v899 = vmul.f32 %v861, 0.1
          %v900 = vmul.f32 %v866, 0.1
          %v901 = vmul.f32 %v871, 0.1
          %v902 = vmul.f32 %v876, 0.1
          %v903 = vmul.f32 %v881, 0.1
          %v904 = vmul.f32 %v886, 0.1
          %v905 = vmul.f32 %v891, 0.1
          %v906 = vmul.f32 %v896, 0.1
          %v907 = vadd.f32 %v745, %v899
          %v908 = vadd.f32 %v746, %v900
          %v909 = vadd.f32 %v747, %v901
          %v910 = vadd.f32 %v748, %v902
          %v911 = vadd.f32 %v749, %v903
          %v912 = vadd.f32 %v750, %v904
          %v913 = vadd.f32 %v751, %v905
          %v914 = vadd.f32 %v752, %v906
          %v915 = vadd.f32 %v681, %v907
          %v916 = vadd.f32 %v682, %v908
          %v917 = vadd.f32 %v683, %v909
          %v918 = vadd.f32 %v684, %v910
          %v919 = vadd.f32 %v685, %v911
          %v920 = vadd.f32 %v686, %v912
          %v921 = vadd.f32 %v687, %v913
          %v922 = vadd.f32 %v688, %v914
          %v923 = vld [vmem:[%s6] sm:$0xff]
          %v924 = vld [vmem:[%s6 + $0x8] sm:$0xff]
          %v925 = vld [vmem:[%s6 + $0x10] sm:$0xff]
          %v926 = vld [vmem:[%s6 + $0x18] sm:$0xff]
          %v927 = vld [vmem:[%s7] sm:$0x1]
          %v929 = vlaneseq
          %v930 = vshrl.u32 %v929, 7
          %v931 = vsub.s32 0, %v930
          %v932 = vrot.slane %v927, %v931
          %v935 = vsel %vm668, %v915, 0
          %v938 = vsel %vm668, %v916, 0
          %v941 = vsel %vm668, %v917, 0
          %v944 = vsel %vm668, %v918, 0
          %v947 = vsel %vm668, %v919, 0
          %v950 = vsel %vm668, %v920, 0
          %v953 = vsel %vm668, %v921, 0
          %v956 = vsel %vm668, %v922, 0
          %958 = vmatprep.subr.mxu0 0.0
          %959 = vmatpush1.msra.mxu0 0.0
          %960 = vmatprep.subr.mxu0 0.0
          %961 = vmatpush1.msra.mxu0 0.0
          %962 = vmatprep.subr.mxu0 0.0
          %963 = vmatpush1.msra.mxu0 0.0
          %964 = vmatprep.subr.mxu0 0.0
          %965 = vmatpush1.msra.mxu0 0.0
          %966 = vmatprep.subr.mxu0 0.0
          %967 = vmatpush1.msra.mxu0 0.0
          %968 = vmatprep.subr.mxu0 0.0
          %969 = vmatpush1.msra.mxu0 0.0
          %970 = vmatprep.subr.mxu0 0.0
          %971 = vmatpush1.msra.mxu0 0.0
          %972 = vmatprep.subr.mxu0 0.0
          %973 = vmatpush1.msra.mxu0 0.0
          %974 = vmatprep.subr.mxu0 0.0
          %975 = vmatpush1.msra.mxu0 0.0
          %976 = vmatprep.subr.mxu0 0.0
          %977 = vmatpush1.msra.mxu0 0.0
          %978 = vmatprep.subr.mxu0 0.0
          %979 = vmatpush1.msra.mxu0 0.0
          %980 = vmatprep.subr.mxu0 0.0
          %981 = vmatpush1.msra.mxu0 0.0
          %982 = vmatprep.subr.mxu0 0.0
          %983 = vmatpush1.msra.mxu0 %v926
          %984 = vmatprep.subr.mxu0 0.0
          %985 = vmatpush1.msra.mxu0 %v925
          %986 = vmatprep.subr.mxu0 0.0
          %987 = vmatpush1.msra.mxu0 %v924
          %988 = vmatprep.subr.mxu0 0.0
          %989 = vmatpush1.msra.mxu0 %v923
          %990 = vmatprep.subr.mxu0 0.0
          %991 = vmatpush2.msra.mxu0 0.0
          %992 = vmatprep.subr.mxu0 0.0
          %993 = vmatpush2.msra.mxu0 0.0
          %994 = vmatprep.subr.mxu0 0.0
          %995 = vmatpush2.msra.mxu0 0.0
          %996 = vmatprep.subr.mxu0 0.0
          %997 = vmatpush2.msra.mxu0 0.0
          %998 = vmatprep.subr.mxu0 0.0
          %999 = vmatpush2.msra.mxu0 0.0
          %1000 = vmatprep.subr.mxu0 0.0
          %1001 = vmatpush2.msra.mxu0 0.0
          %1002 = vmatprep.subr.mxu0 0.0
          %1003 = vmatpush2.msra.mxu0 0.0
          %1004 = vmatprep.subr.mxu0 0.0
          %1005 = vmatpush2.msra.mxu0 0.0
          %1006 = vmatprep.subr.mxu0 0.0
          %1007 = vmatpush2.msra.mxu0 0.0
          %1008 = vmatprep.subr.mxu0 0.0
          %1009 = vmatpush2.msra.mxu0 0.0
          %1010 = vmatprep.subr.mxu0 0.0
          %1011 = vmatpush2.msra.mxu0 0.0
          %1012 = vmatprep.subr.mxu0 0.0
          %1013 = vmatpush2.msra.mxu0 0.0
          %1014 = vmatprep.subr.mxu0 0.0
          %1015 = vmatpush2.msra.mxu0 0.0
          %1016 = vmatprep.subr.mxu0 0.0
          %1017 = vmatpush2.msra.mxu0 0.0
          %1018 = vmatprep.subr.mxu0 0.0
          %1019 = vmatpush2.msra.mxu0 0.0
          %1020 = vmatprep.subr.mxu0 0.0
          %1021 = vmatpush2.msra.mxu0 0.0
          %1022 = vmatprep.mubr.f32.mxu0 0.0
          %1023 = vmatmul.mubr.f32.gmra.mxu0 %v935
          %v1024 = vpop.f32.mrf.mxu0
          %v1025 = vadd.f32 %v932, %v1024
          %v1026 = vpop.f32.mrf.mxu0
          %1027 = vmatprep.mubr.f32.mxu0 0.0
          %1028 = vmatmul.mubr.f32.gmra.mxu0 %v938
          %v1029 = vpop.f32.mrf.mxu0
          %v1030 = vadd.f32 %v932, %v1029
          %v1031 = vpop.f32.mrf.mxu0
          %1032 = vmatprep.mubr.f32.mxu0 0.0
          %1033 = vmatmul.mubr.f32.gmra.mxu0 %v941
          %v1034 = vpop.f32.mrf.mxu0
          %v1035 = vadd.f32 %v932, %v1034
          %v1036 = vpop.f32.mrf.mxu0
          %1037 = vmatprep.mubr.f32.mxu0 0.0
          %1038 = vmatmul.mubr.f32.gmra.mxu0 %v944
          %v1039 = vpop.f32.mrf.mxu0
          %v1040 = vadd.f32 %v932, %v1039
          %v1041 = vpop.f32.mrf.mxu0
          %1042 = vmatprep.mubr.f32.mxu0 0.0
          %1043 = vmatmul.mubr.f32.gmra.mxu0 %v947
          %v1044 = vpop.f32.mrf.mxu0
          %v1045 = vadd.f32 %v932, %v1044
          %v1046 = vpop.f32.mrf.mxu0
          %1047 = vmatprep.mubr.f32.mxu0 0.0
          %1048 = vmatmul.mubr.f32.gmra.mxu0 %v950
          %v1049 = vpop.f32.mrf.mxu0
          %v1050 = vadd.f32 %v932, %v1049
          %v1051 = vpop.f32.mrf.mxu0
          %1052 = vmatprep.mubr.f32.mxu0 0.0
          %1053 = vmatmul.mubr.f32.gmra.mxu0 %v953
          %v1054 = vpop.f32.mrf.mxu0
          %v1055 = vadd.f32 %v932, %v1054
          %v1056 = vpop.f32.mrf.mxu0
          %1057 = vmatprep.mubr.f32.mxu0 0.0
          %1058 = vmatmul.mubr.f32.gmra.mxu0 %v956
          %v1059 = vpop.f32.mrf.mxu0
          %v1060 = vadd.f32 %v932, %v1059
          %v1061 = vpop.f32.mrf.mxu0
          %1062 = vdwg.mxu0
          %vm1063 = vcmp.gt.f32.partialorder %v1025, 0.0
          %vm1064 = vcmp.gt.f32.partialorder %v1030, 0.0
          %vm1065 = vcmp.gt.f32.partialorder %v1035, 0.0
          %vm1066 = vcmp.gt.f32.partialorder %v1040, 0.0
          %vm1067 = vcmp.gt.f32.partialorder %v1045, 0.0
          %vm1068 = vcmp.gt.f32.partialorder %v1050, 0.0
          %vm1069 = vcmp.gt.f32.partialorder %v1055, 0.0
          %vm1070 = vcmp.gt.f32.partialorder %v1060, 0.0
          %v1071 = vmul.f32 %v1025, 0.01
          %v1072 = vmul.f32 %v1030, 0.01
          %v1073 = vmul.f32 %v1035, 0.01
          %v1074 = vmul.f32 %v1040, 0.01
          %v1075 = vmul.f32 %v1045, 0.01
          %v1076 = vmul.f32 %v1050, 0.01
          %v1077 = vmul.f32 %v1055, 0.01
          %v1078 = vmul.f32 %v1060, 0.01
          %v1079 = vsel %vm1063, %v1025, %v1071
          %v1080 = vsel %vm1064, %v1030, %v1072
          %v1081 = vsel %vm1065, %v1035, %v1073
          %v1082 = vsel %vm1066, %v1040, %v1074
          %v1083 = vsel %vm1067, %v1045, %v1075
          %v1084 = vsel %vm1068, %v1050, %v1076
          %v1085 = vsel %vm1069, %v1055, %v1077
          %v1086 = vsel %vm1070, %v1060, %v1078
          %v1087 = vmul.f32 %v681, %v907
          %v1088 = vmul.f32 %v682, %v908
          %v1089 = vmul.f32 %v683, %v909
          %v1090 = vmul.f32 %v684, %v910
          %v1091 = vmul.f32 %v685, %v911
          %v1092 = vmul.f32 %v686, %v912
          %v1093 = vmul.f32 %v687, %v913
          %v1094 = vmul.f32 %v688, %v914
          %v1095 = vld [vmem:[%s8] sm:$0xff]
          %v1096 = vld [vmem:[%s8 + $0x8] sm:$0xff]
          %v1097 = vld [vmem:[%s8 + $0x10] sm:$0xff]
          %v1098 = vld [vmem:[%s8 + $0x18] sm:$0xff]
          %v1099 = vld [vmem:[%s9] sm:$0x1]
          %v1101 = vlaneseq
          %v1102 = vshrl.u32 %v1101, 7
          %v1103 = vsub.s32 0, %v1102
          %v1104 = vrot.slane %v1099, %v1103
          %v1107 = vsel %vm668, %v1087, 0
          %v1110 = vsel %vm668, %v1088, 0
          %v1113 = vsel %vm668, %v1089, 0
          %v1116 = vsel %vm668, %v1090, 0
          %v1119 = vsel %vm668, %v1091, 0
          %v1122 = vsel %vm668, %v1092, 0
          %v1125 = vsel %vm668, %v1093, 0
          %v1128 = vsel %vm668, %v1094, 0
          %1130 = vmatprep.subr.mxu0 0.0
          %1131 = vmatpush1.msra.mxu0 0.0
          %1132 = vmatprep.subr.mxu0 0.0
          %1133 = vmatpush1.msra.mxu0 0.0
          %1134 = vmatprep.subr.mxu0 0.0
          %1135 = vmatpush1.msra.mxu0 0.0
          %1136 = vmatprep.subr.mxu0 0.0
          %1137 = vmatpush1.msra.mxu0 0.0
          %1138 = vmatprep.subr.mxu0 0.0
          %1139 = vmatpush1.msra.mxu0 0.0
          %1140 = vmatprep.subr.mxu0 0.0
          %1141 = vmatpush1.msra.mxu0 0.0
          %1142 = vmatprep.subr.mxu0 0.0
          %1143 = vmatpush1.msra.mxu0 0.0
          %1144 = vmatprep.subr.mxu0 0.0
          %1145 = vmatpush1.msra.mxu0 0.0
          %1146 = vmatprep.subr.mxu0 0.0
          %1147 = vmatpush1.msra.mxu0 0.0
          %1148 = vmatprep.subr.mxu0 0.0
          %1149 = vmatpush1.msra.mxu0 0.0
          %1150 = vmatprep.subr.mxu0 0.0
          %1151 = vmatpush1.msra.mxu0 0.0
          %1152 = vmatprep.subr.mxu0 0.0
          %1153 = vmatpush1.msra.mxu0 0.0
          %1154 = vmatprep.subr.mxu0 0.0
          %1155 = vmatpush1.msra.mxu0 %v1098
          %1156 = vmatprep.subr.mxu0 0.0
          %1157 = vmatpush1.msra.mxu0 %v1097
          %1158 = vmatprep.subr.mxu0 0.0
          %1159 = vmatpush1.msra.mxu0 %v1096
          %1160 = vmatprep.subr.mxu0 0.0
          %1161 = vmatpush1.msra.mxu0 %v1095
          %1162 = vmatprep.subr.mxu0 0.0
          %1163 = vmatpush2.msra.mxu0 0.0
          %1164 = vmatprep.subr.mxu0 0.0
          %1165 = vmatpush2.msra.mxu0 0.0
          %1166 = vmatprep.subr.mxu0 0.0
          %1167 = vmatpush2.msra.mxu0 0.0
          %1168 = vmatprep.subr.mxu0 0.0
          %1169 = vmatpush2.msra.mxu0 0.0
          %1170 = vmatprep.subr.mxu0 0.0
          %1171 = vmatpush2.msra.mxu0 0.0
          %1172 = vmatprep.subr.mxu0 0.0
          %1173 = vmatpush2.msra.mxu0 0.0
          %1174 = vmatprep.subr.mxu0 0.0
          %1175 = vmatpush2.msra.mxu0 0.0
          %1176 = vmatprep.subr.mxu0 0.0
          %1177 = vmatpush2.msra.mxu0 0.0
          %1178 = vmatprep.subr.mxu0 0.0
          %1179 = vmatpush2.msra.mxu0 0.0
          %1180 = vmatprep.subr.mxu0 0.0
          %1181 = vmatpush2.msra.mxu0 0.0
          %1182 = vmatprep.subr.mxu0 0.0
          %1183 = vmatpush2.msra.mxu0 0.0
          %1184 = vmatprep.subr.mxu0 0.0
          %1185 = vmatpush2.msra.mxu0 0.0
          %1186 = vmatprep.subr.mxu0 0.0
          %1187 = vmatpush2.msra.mxu0 0.0
          %1188 = vmatprep.subr.mxu0 0.0
          %1189 = vmatpush2.msra.mxu0 0.0
          %1190 = vmatprep.subr.mxu0 0.0
          %1191 = vmatpush2.msra.mxu0 0.0
          %1192 = vmatprep.subr.mxu0 0.0
          %1193 = vmatpush2.msra.mxu0 0.0
          %1194 = vmatprep.mubr.f32.mxu0 0.0
          %1195 = vmatmul.mubr.f32.gmra.mxu0 %v1107
          %v1196 = vpop.f32.mrf.mxu0
          %v1197 = vadd.f32 %v1104, %v1196
          %v1198 = vpop.f32.mrf.mxu0
          %1199 = vmatprep.mubr.f32.mxu0 0.0
          %1200 = vmatmul.mubr.f32.gmra.mxu0 %v1110
          %v1201 = vpop.f32.mrf.mxu0
          %v1202 = vadd.f32 %v1104, %v1201
          %v1203 = vpop.f32.mrf.mxu0
          %1204 = vmatprep.mubr.f32.mxu0 0.0
          %1205 = vmatmul.mubr.f32.gmra.mxu0 %v1113
          %v1206 = vpop.f32.mrf.mxu0
          %v1207 = vadd.f32 %v1104, %v1206
          %v1208 = vpop.f32.mrf.mxu0
          %1209 = vmatprep.mubr.f32.mxu0 0.0
          %1210 = vmatmul.mubr.f32.gmra.mxu0 %v1116
          %v1211 = vpop.f32.mrf.mxu0
          %v1212 = vadd.f32 %v1104, %v1211
          %v1213 = vpop.f32.mrf.mxu0
          %1214 = vmatprep.mubr.f32.mxu0 0.0
          %1215 = vmatmul.mubr.f32.gmra.mxu0 %v1119
          %v1216 = vpop.f32.mrf.mxu0
          %v1217 = vadd.f32 %v1104, %v1216
          %v1218 = vpop.f32.mrf.mxu0
          %1219 = vmatprep.mubr.f32.mxu0 0.0
          %1220 = vmatmul.mubr.f32.gmra.mxu0 %v1122
          %v1221 = vpop.f32.mrf.mxu0
          %v1222 = vadd.f32 %v1104, %v1221
          %v1223 = vpop.f32.mrf.mxu0
          %1224 = vmatprep.mubr.f32.mxu0 0.0
          %1225 = vmatmul.mubr.f32.gmra.mxu0 %v1125
          %v1226 = vpop.f32.mrf.mxu0
          %v1227 = vadd.f32 %v1104, %v1226
          %v1228 = vpop.f32.mrf.mxu0
          %1229 = vmatprep.mubr.f32.mxu0 0.0
          %1230 = vmatmul.mubr.f32.gmra.mxu0 %v1128
          %v1231 = vpop.f32.mrf.mxu0
          %v1232 = vadd.f32 %v1104, %v1231
          %v1233 = vpop.f32.mrf.mxu0
          %1234 = vdwg.mxu0
          %vm1235 = vcmp.gt.f32.partialorder %v1197, 0.0
          %vm1236 = vcmp.gt.f32.partialorder %v1202, 0.0
          %vm1237 = vcmp.gt.f32.partialorder %v1207, 0.0
          %vm1238 = vcmp.gt.f32.partialorder %v1212, 0.0
          %vm1239 = vcmp.gt.f32.partialorder %v1217, 0.0
          %vm1240 = vcmp.gt.f32.partialorder %v1222, 0.0
          %vm1241 = vcmp.gt.f32.partialorder %v1227, 0.0
          %vm1242 = vcmp.gt.f32.partialorder %v1232, 0.0
          %v1243 = vmul.f32 %v1197, 0.01
          %v1244 = vmul.f32 %v1202, 0.01
          %v1245 = vmul.f32 %v1207, 0.01
          %v1246 = vmul.f32 %v1212, 0.01
          %v1247 = vmul.f32 %v1217, 0.01
          %v1248 = vmul.f32 %v1222, 0.01
          %v1249 = vmul.f32 %v1227, 0.01
          %v1250 = vmul.f32 %v1232, 0.01
          %v1251 = vsel %vm1235, %v1197, %v1243
          %v1252 = vsel %vm1236, %v1202, %v1244
          %v1253 = vsel %vm1237, %v1207, %v1245
          %v1254 = vsel %vm1238, %v1212, %v1246
          %v1255 = vsel %vm1239, %v1217, %v1247
          %v1256 = vsel %vm1240, %v1222, %v1248
          %v1257 = vsel %vm1241, %v1227, %v1249
          %v1258 = vsel %vm1242, %v1232, %v1250
          %v1259 = vadd.f32 %v1251, %v1079
          %v1260 = vadd.f32 %v1252, %v1080
          %v1261 = vadd.f32 %v1253, %v1081
          %v1262 = vadd.f32 %v1254, %v1082
          %v1263 = vadd.f32 %v1255, %v1083
          %v1264 = vadd.f32 %v1256, %v1084
          %v1265 = vadd.f32 %v1257, %v1085
          %v1266 = vadd.f32 %v1258, %v1086
          %1267 = vst.msk [vmem:[%s506] sm:$0xff] %vm668, %v1259
          %1268 = vst.msk [vmem:[%s506 + $0x8] sm:$0xff] %vm668, %v1260
          %1269 = vst.msk [vmem:[%s506 + $0x10] sm:$0xff] %vm668, %v1261
          %1270 = vst.msk [vmem:[%s506 + $0x18] sm:$0xff] %vm668, %v1262
          %1271 = vst.msk [vmem:[%s506 + $0x20] sm:$0xff] %vm668, %v1263
          %1272 = vst.msk [vmem:[%s506 + $0x28] sm:$0xff] %vm668, %v1264
          %1273 = vst.msk [vmem:[%s506 + $0x30] sm:$0xff] %vm668, %v1265
          %1274 = vst.msk [vmem:[%s506 + $0x38] sm:$0xff] %vm668, %v1266
        $region106: #{tpu_custom_call.1} parent=93 // pred_fallthru
          _
        %s1275 = smul.u32 8, %s25
        %p1276 = scmp.lt.s32.totalorder %s1275, 31
        %s1277 = scalar_select %p1276, %s1275, 31
        %s1278 = smul.addr %s1277, 8
        %s1279 = scalar_lea.vmem %s10, %s1278
        // Predicated region
        $region107: #{tpu_custom_call.1} parent=93 // pred_check
          %p1280 = pneg %p283
        $region108: #{tpu_custom_call.1} parent=93 // pred_check_branch
          %1282 = sbr.rel (%p1280) target = $region110
        $region109: #{tpu_custom_call.1} parent=93 // pred_region
          %s1283 = smul.u32 8, %s25
        $region110: #{tpu_custom_call.1} parent=93 // pred_fallthru
          _
      $region94: #{tpu_custom_call.1} parent=5 // pred_fallthru
        _
      %p1284 = scmp.le.s32.totalorder 2, %s16
      // Predicated region
      $region111: #{tpu_custom_call.1} parent=5 // pred_check
        %p1285 = pneg %p1284
      $region112: #{tpu_custom_call.1} parent=5 // pred_check_branch
        %1287 = sbr.rel (%p1285) target = $region114
      $region113: #{tpu_custom_call.1} parent=5 // pred_region
        %s1288 = ssub.s32 %s16, 2
        // Predicated region
        $region115: #{tpu_custom_call.1} parent=113 // pred_check
          %p1289 = pneg %p289
        $region116: #{tpu_custom_call.1} parent=113 // pred_check_branch
          %1291 = sbr.rel (%p1289) target = $region118
        $region117: #{tpu_custom_call.1} parent=113 // pred_region
          %s1292 = smul.u32 8, %s27
          %p1293 = scmp.lt.s32.totalorder %s1292, 31
          %s1294 = scalar_select %p1293, %s1292, 31
          %s1295 = smul.addr %s1294, 8
          %s1296 = scalar_lea.vmem %s10, %s1295
        $region118: #{tpu_custom_call.1} parent=113 // pred_fallthru
          _
      $region114: #{tpu_custom_call.1} parent=5 // pred_fallthru
        _
    $region6: #{tpu_custom_call.1} parent=1 // loop_footer
      %s20 = sadd.s32 1, %s16
    $region7: #{tpu_custom_call.1} parent=1 // loop_footer_branch
      %15 = sbr.rel target = $region3
    $region8: #{tpu_custom_call.1} parent=1 // loop_exit
      _

</llo_original>
